<compile_context>
chip_gen: v6e
topology: v6e:2x2x1
jax: 0.10.0
libtpu: 0.0.40
codegen_flags: <defaults>
</compile_context>

<pallas_src>
import functools

import jax
import jax.numpy as jnp
import numpy as np
from jax.experimental import pallas as pl
from jax.experimental.pallas import tpu as pltpu


def _round_up(n, m):
    return ((n + m - 1) // m) * m


def _cdiv(a, b):
    return (a + b - 1) // b


def nhits_block_kernel(x_ref, w1_ref, b1_ref, w2_ref, b2_ref, w34_ref, b34_ref,
                       o_ref, *, pool_k):
    """One (TB, Ipad) batch tile of the NHITS block. Weights stay resident."""
    x = x_ref[...]                      # (TB, Ipad); lanes >= input_size are 0
    ipad = x.shape[-1]

    # MaxPool1d(kernel=pool_k, stride=1, padding=0): sliding max built from XLU
    # lane rotations of the running max (log2 doubling -> ceil(log2 k) rolls).
    # Done in f32 so it is portable to v5e's f32-only VPU; the converts are
    # cheap VPU filler in this DMA/overhead-bound regime.
    # Lanes >= pooled_size end up with junk, but the lane pad is explicit zeros
    # (finite) and w1's rows for those lanes are zero-padded, so they contribute
    # nothing to the first matmul (see prepare_params -- keep the two in sync).
    pooled = x.astype(jnp.float32)
    cover = 1
    while cover < pool_k:
        shift = min(cover, pool_k - cover)
        pooled = jnp.maximum(pooled, pltpu.roll(pooled, ipad - shift, 1))
        cover += shift

    w1 = w1_ref[...]
    cdt = w1.dtype                      # MXU operand dtype (f32 or bf16)

    # Linear -> ReLU -> Linear -> ReLU -> fused(Linear; Linear)   (f32 accum)
    h = jnp.dot(pooled.astype(cdt), w1, preferred_element_type=jnp.float32)
    h = jnp.maximum(h + b1_ref[...], 0.0)
    h = jnp.dot(h.astype(cdt), w2_ref[...], preferred_element_type=jnp.float32)
    h = jnp.maximum(h + b2_ref[...], 0.0)
    y = jnp.dot(h.astype(cdt), w34_ref[...],
                preferred_element_type=jnp.float32) + b34_ref[...]
    o_ref[...] = y.astype(o_ref.dtype)


def prepare_params(params, *, input_size, pooling_kernel_size,
                   param_dtype=jnp.float32):
    """One-time param prep: transpose to (in, out), fuse the trailing Linear
    pair, and zero-pad to 128-lane multiples.

    param_dtype=bf16 is a valid fast path on ALL generations (v5e/v6e/v7x MXUs
    are bf16-native); accumulation and the bias/ReLU epilogue stay f32 in the
    kernel.  The fused W34 = W3^T Wp^T and b34 = b3 Wp^T + bp are computed in
    f32 and only then cast.
    NOTE: the kernel relies on the zero padding produced here (junk pooled
    lanes are annihilated by w1's zero rows) -- do not change one without the
    other.
    """
    w1, b1, w2, b2, w3, b3, wp, bp = params
    hidden = w1.shape[0]
    pooled_size = input_size - pooling_kernel_size + 1
    assert w1.shape[1] == pooled_size
    assert wp.shape == (input_size, w3.shape[0])

    ipad = _round_up(input_size, 128)
    hpad = _round_up(hidden, 128)

    # Fuse mlp[4] (hidden->output) with projection (output->input):
    #   y = (h @ W3^T + b3) @ Wp^T + bp = h @ (W3^T Wp^T) + (b3 Wp^T + bp)
    w34_t = w3.T.astype(jnp.float32) @ wp.T.astype(jnp.float32)      # (hid, in)
    b34 = (b3.astype(jnp.float32) @ wp.T.astype(jnp.float32)
           + bp.astype(jnp.float32))

    def pad_w(w_t, rpad, cpad):          # w_t already (in, out)
        r, c = w_t.shape
        return jnp.zeros((rpad, cpad), param_dtype).at[:r, :c].set(
            w_t.astype(param_dtype))

    def pad_b(b, npad):                  # biases stay f32 (f32 epilogue)
        return jnp.zeros((1, npad), jnp.float32).at[0, :b.shape[0]].set(
            b.astype(jnp.float32))

    return (
        pad_w(w1.T, ipad, hpad), pad_b(b1, hpad),   # pooled rows live in [0, P)
        pad_w(w2.T, hpad, hpad), pad_b(b2, hpad),
        pad_w(w34_t, hpad, ipad), pad_b(b34, ipad),
    )


def _vmem_cap_bytes():
    """Physical VMEM per TensorCore (generation-aware), safe fallback."""
    try:
        return int(pltpu.get_tpu_info().vmem_capacity_bytes)
    except Exception:
        return 64 << 20          # v7x per-TC physical = smallest across gens


def nhits_block(x, prepared, *, input_size, pooling_kernel_size,
                block_batch=None, single_buffer_weights=True):
    """Gridded Pallas launch: batch-tiled x/out, VMEM-resident weights."""
    batch = x.shape[0]
    w1p, b1p, w2p, b2p, w34p, b34p = prepared
    weight_args = (w1p, b1p, w2p, b2p, w34p, b34p)
    ipad, hpad = w1p.shape
    act_dtype = w1p.dtype               # stream activations in the weight dtype

    # Batch tile: multiple of 8 sublanes.  Per-step overhead (~0.35us) and MXU
    # fill/drain dominate small tiles, so go big (up to 1024 rows) -- but keep
    # >= 2 grid steps whenever batch > 8 so the "parallel" axis can shard over
    # both TensorCores on v7x.
    if block_batch is None:
        if batch <= 8:
            tb = 8
        else:
            tb = min(1024, _round_up(_cdiv(batch, 2), 8))
    else:
        tb = _round_up(block_batch, 8)
    tb = min(tb, _round_up(batch, 8))
    grid = _cdiv(batch, tb)

    # Lane pad only (explicit zeros -> finite junk lanes).  No batch-row pad:
    # Pallas masks the ragged last block's out-of-bounds rows.  Pad and final
    # slice stay inside the caller's jit so XLA fuses them with the call.
    x_pad = jnp.pad(x.astype(act_dtype), ((0, 0), (0, ipad - input_size)))

    # VMEM budget: resident weights (x1 single-buffered, else x2) + streamed
    # x/out tiles (double-buffered) + live f32 intermediates; 1.5x margin,
    # floored modestly against under-estimation, capped below physical VMEM
    # with headroom for Mosaic internal scratch (matters on v7x's 64 MiB).
    wbuf = 1 if single_buffer_weights else 2
    weight_bytes = wbuf * sum(int(np.prod(a.shape)) * a.dtype.itemsize
                              for a in weight_args)
    stream_bytes = 2 * tb * ipad * (x_pad.dtype.itemsize + 4)
    scratch_bytes = 4 * tb * max(ipad, hpad) * 4
    est = weight_bytes + stream_bytes + scratch_bytes
    cap = _vmem_cap_bytes() - (8 << 20)
    vmem_limit = int(min(max(int(1.5 * est) + (4 << 20), 16 << 20), cap))

    kernel = functools.partial(nhits_block_kernel, pool_k=pooling_kernel_size)

    x_spec = pl.BlockSpec((tb, ipad), lambda i: (i, 0))
    out_spec = pl.BlockSpec((tb, ipad), lambda i: (i, 0))
    # Constant index_map => weights are DMA'd once and stay resident.
    # Buffered(1) drops the never-used second buffer (halves resident bytes).
    if single_buffer_weights:
        weight_specs = [pl.BlockSpec(a.shape, lambda i: (0, 0),
                                     pipeline_mode=pl.Buffered(1))
                        for a in weight_args]
    else:
        weight_specs = [pl.BlockSpec(a.shape, lambda i: (0, 0))
                        for a in weight_args]

    out = pl.pallas_call(
        kernel,
        out_shape=jax.ShapeDtypeStruct((batch, ipad), jnp.float32),
        grid_spec=pltpu.PrefetchScalarGridSpec(
            num_scalar_prefetch=0,
            grid=(grid,),
            in_specs=[x_spec] + weight_specs,
            out_specs=out_spec,
        ),
        compiler_params=pltpu.CompilerParams(
            dimension_semantics=("parallel",),
            vmem_limit_bytes=vmem_limit,
        ),
    )(x_pad, *weight_args)

    return out[:, :input_size]


def nhits_block_ref(x, params, pooling_kernel_size):
    """Pure-JAX reference matching the PyTorch forward (unfused)."""
    w1, b1, w2, b2, w3, b3, wp, bp = params
    k = pooling_kernel_size
    pooled_size = x.shape[1] - k + 1
    pooled = x[:, 0:pooled_size]
    for j in range(1, k):
        pooled = jnp.maximum(pooled, x[:, j:j + pooled_size])
    h = jax.nn.relu(pooled @ w1.T + b1)
    h = jax.nn.relu(h @ w2.T + b2)
    h = h @ w3.T + b3
    return h @ wp.T + bp


def init_params(key, input_size, output_size, pooling_kernel_size, hidden_size):
    """Deterministic synthetic parameters, PyTorch nn.Linear shapes (out, in)."""
    pooled_size = input_size - pooling_kernel_size + 1
    shapes = [
        (hidden_size, pooled_size), (hidden_size,),   # mlp[0]
        (hidden_size, hidden_size), (hidden_size,),   # mlp[2]
        (output_size, hidden_size), (output_size,),   # mlp[4]
        (input_size, output_size), (input_size,),     # projection
    ]
    keys = jax.random.split(key, len(shapes))
    return tuple(0.1 * jax.random.normal(k, s, dtype=jnp.float32)
                 for k, s in zip(keys, shapes))


if __name__ == "__main__":
    batch = 32
    input_size = 24
    output_size = 8
    pooling_kernel_size = 4
    hidden_size = 32

    key = jax.random.PRNGKey(0)
    k_x, k_p = jax.random.split(key)
    x = jax.random.normal(k_x, (batch, input_size), dtype=jnp.float32)
    params = init_params(k_p, input_size, output_size, pooling_kernel_size,
                         hidden_size)

    ref = jax.block_until_ready(nhits_block_ref(x, params, pooling_kernel_size))

    def make_run(single_buffer):
        return jax.jit(functools.partial(
            nhits_block, input_size=input_size,
            pooling_kernel_size=pooling_kernel_size,
            single_buffer_weights=single_buffer))

    # f32 weights: near-exact path (fused trailing Linears change rounding only).
    prep_f32 = prepare_params(params, input_size=input_size,
                              pooling_kernel_size=pooling_kernel_size,
                              param_dtype=jnp.float32)
    try:
        run = make_run(True)
        out_f32 = jax.block_until_ready(run(x, prep_f32))
    except Exception:
        # Fallback if this JAX build rejects pl.Buffered(1) on the weight specs.
        run = make_run(False)
        out_f32 = jax.block_until_ready(run(x, prep_f32))
    np.testing.assert_allclose(np.asarray(out_f32), np.asarray(ref),
                               rtol=1e-4, atol=1e-4)

    # bf16 weights + bf16-streamed activations (valid on v5e/v6e/v7x),
    # f32 accumulation -> looser tolerance.
    prep_bf16 = prepare_params(params, input_size=input_size,
                               pooling_kernel_size=pooling_kernel_size,
                               param_dtype=jnp.bfloat16)
    out_bf16 = jax.block_until_ready(run(x, prep_bf16))
    np.testing.assert_allclose(np.asarray(out_bf16), np.asarray(ref),
                               rtol=5e-2, atol=5e-2)

    print("KERNEL_OK")
</pallas_src>

<mosaic_0001>
module attributes {stable_mosaic.version = 11 : i64} {
  func.func @nhits_block_kernel(%arg0: i32, %arg1: memref<16x128xf32, #tpu.memory_space<vmem>>, %arg2: memref<128x128xf32, #tpu.memory_space<vmem>>, %arg3: memref<1x128xf32, #tpu.memory_space<vmem>>, %arg4: memref<128x128xf32, #tpu.memory_space<vmem>>, %arg5: memref<1x128xf32, #tpu.memory_space<vmem>>, %arg6: memref<128x128xf32, #tpu.memory_space<vmem>>, %arg7: memref<1x128xf32, #tpu.memory_space<vmem>>, %arg8: memref<16x128xf32, #tpu.memory_space<vmem>>) attributes {dimension_semantics = [#tpu.dimension_semantics<parallel>], iteration_bounds = array<i64: 2>, scalar_prefetch = 0 : i64, scratch_operands = 0 : i64, tpu.core_type = #tpu.core_type<tc>, window_params = [{transform_indices = @transform_0, window_bounds = array<i64: 16, 128>}, {pipeline_mode = #tpu.pipeline_mode<synchronous>, transform_indices = @transform_1, window_bounds = array<i64: 128, 128>}, {pipeline_mode = #tpu.pipeline_mode<synchronous>, transform_indices = @transform_2, window_bounds = array<i64: 1, 128>}, {pipeline_mode = #tpu.pipeline_mode<synchronous>, transform_indices = @transform_3, window_bounds = array<i64: 128, 128>}, {pipeline_mode = #tpu.pipeline_mode<synchronous>, transform_indices = @transform_4, window_bounds = array<i64: 1, 128>}, {pipeline_mode = #tpu.pipeline_mode<synchronous>, transform_indices = @transform_5, window_bounds = array<i64: 128, 128>}, {pipeline_mode = #tpu.pipeline_mode<synchronous>, transform_indices = @transform_6, window_bounds = array<i64: 1, 128>}, {transform_indices = @transform_7, window_bounds = array<i64: 16, 128>}]} {
    %c0 = arith.constant 0 : index
    %c0_0 = arith.constant 0 : index
    %0 = vector.load %arg1[%c0, %c0_0] : memref<16x128xf32, #tpu.memory_space<vmem>>, vector<16x128xf32>
    %c127_i32 = arith.constant 127 : i32
    %1 = tpu.dynamic_rotate %0 by %c127_i32 dim 1 : vector<16x128xf32>, i32 -> vector<16x128xf32>
    %2 = arith.maximumf %0, %1 : vector<16x128xf32>
    %c126_i32 = arith.constant 126 : i32
    %3 = tpu.dynamic_rotate %2 by %c126_i32 dim 1 : vector<16x128xf32>, i32 -> vector<16x128xf32>
    %4 = arith.maximumf %2, %3 : vector<16x128xf32>
    %c0_1 = arith.constant 0 : index
    %c0_2 = arith.constant 0 : index
    %5 = vector.load %arg2[%c0_1, %c0_2] : memref<128x128xf32, #tpu.memory_space<vmem>>, vector<128x128xf32>
    %cst = arith.constant dense<0.000000e+00> : vector<16x128xf32>
    %6 = tpu.matmul %4, %5, %cst {dimension_numbers = #tpu.dot_dimension_numbers<[1], [0], [0], [1], [0, 0, 1, 1], [], []>} : vector<16x128xf32>, vector<128x128xf32>, vector<16x128xf32> -> vector<16x128xf32>
    %c0_3 = arith.constant 0 : index
    %c0_4 = arith.constant 0 : index
    %7 = vector.load %arg3[%c0_3, %c0_4] : memref<1x128xf32, #tpu.memory_space<vmem>>, vector<1x128xf32>
    %8 = vector.broadcast %7 : vector<1x128xf32> to vector<16x128xf32>
    %9 = arith.addf %6, %8 : vector<16x128xf32>
    %cst_5 = arith.constant 0.000000e+00 : f32
    %10 = vector.broadcast %cst_5 : f32 to vector<16x128xf32>
    %11 = arith.maximumf %9, %10 : vector<16x128xf32>
    %c0_6 = arith.constant 0 : index
    %c0_7 = arith.constant 0 : index
    %12 = vector.load %arg4[%c0_6, %c0_7] : memref<128x128xf32, #tpu.memory_space<vmem>>, vector<128x128xf32>
    %cst_8 = arith.constant dense<0.000000e+00> : vector<16x128xf32>
    %13 = tpu.matmul %11, %12, %cst_8 {dimension_numbers = #tpu.dot_dimension_numbers<[1], [0], [0], [1], [0, 0, 1, 1], [], []>} : vector<16x128xf32>, vector<128x128xf32>, vector<16x128xf32> -> vector<16x128xf32>
    %c0_9 = arith.constant 0 : index
    %c0_10 = arith.constant 0 : index
    %14 = vector.load %arg5[%c0_9, %c0_10] : memref<1x128xf32, #tpu.memory_space<vmem>>, vector<1x128xf32>
    %15 = vector.broadcast %14 : vector<1x128xf32> to vector<16x128xf32>
    %16 = arith.addf %13, %15 : vector<16x128xf32>
    %cst_11 = arith.constant 0.000000e+00 : f32
    %17 = vector.broadcast %cst_11 : f32 to vector<16x128xf32>
    %18 = arith.maximumf %16, %17 : vector<16x128xf32>
    %c0_12 = arith.constant 0 : index
    %c0_13 = arith.constant 0 : index
    %19 = vector.load %arg6[%c0_12, %c0_13] : memref<128x128xf32, #tpu.memory_space<vmem>>, vector<128x128xf32>
    %cst_14 = arith.constant dense<0.000000e+00> : vector<16x128xf32>
    %20 = tpu.matmul %18, %19, %cst_14 {dimension_numbers = #tpu.dot_dimension_numbers<[1], [0], [0], [1], [0, 0, 1, 1], [], []>} : vector<16x128xf32>, vector<128x128xf32>, vector<16x128xf32> -> vector<16x128xf32>
    %c0_15 = arith.constant 0 : index
    %c0_16 = arith.constant 0 : index
    %21 = vector.load %arg7[%c0_15, %c0_16] : memref<1x128xf32, #tpu.memory_space<vmem>>, vector<1x128xf32>
    %22 = vector.broadcast %21 : vector<1x128xf32> to vector<16x128xf32>
    %23 = arith.addf %20, %22 : vector<16x128xf32>
    %c0_17 = arith.constant 0 : index
    %c0_18 = arith.constant 0 : index
    %24 = vector.load %arg8[%c0_17, %c0_18] : memref<16x128xf32, #tpu.memory_space<vmem>>, vector<16x128xf32>
    tpu.vector_store %arg8[%c0_17, %c0_18], %23 {strides = array<i32>} : memref<16x128xf32, #tpu.memory_space<vmem>>, vector<16x128xf32>,
    return
  }
  func.func @transform_0(%arg0: i32) -> (i32, i32) {
    %c0_i32 = arith.constant 0 : i32
    %c0_i32_0 = arith.constant 0 : i32
    return %arg0, %c0_i32 : i32, i32
  }
  func.func @transform_1(%arg0: i32) -> (i32, i32) {
    %c0_i32 = arith.constant 0 : i32
    %c0_i32_0 = arith.constant 0 : i32
    %c0_i32_1 = arith.constant 0 : i32
    return %c0_i32, %c0_i32_0 : i32, i32
  }
  func.func @transform_2(%arg0: i32) -> (i32, i32) {
    %c0_i32 = arith.constant 0 : i32
    %c0_i32_0 = arith.constant 0 : i32
    %c0_i32_1 = arith.constant 0 : i32
    return %c0_i32, %c0_i32_0 : i32, i32
  }
  func.func @transform_3(%arg0: i32) -> (i32, i32) {
    %c0_i32 = arith.constant 0 : i32
    %c0_i32_0 = arith.constant 0 : i32
    %c0_i32_1 = arith.constant 0 : i32
    return %c0_i32, %c0_i32_0 : i32, i32
  }
  func.func @transform_4(%arg0: i32) -> (i32, i32) {
    %c0_i32 = arith.constant 0 : i32
    %c0_i32_0 = arith.constant 0 : i32
    %c0_i32_1 = arith.constant 0 : i32
    return %c0_i32, %c0_i32_0 : i32, i32
  }
  func.func @transform_5(%arg0: i32) -> (i32, i32) {
    %c0_i32 = arith.constant 0 : i32
    %c0_i32_0 = arith.constant 0 : i32
    %c0_i32_1 = arith.constant 0 : i32
    return %c0_i32, %c0_i32_0 : i32, i32
  }
  func.func @transform_6(%arg0: i32) -> (i32, i32) {
    %c0_i32 = arith.constant 0 : i32
    %c0_i32_0 = arith.constant 0 : i32
    %c0_i32_1 = arith.constant 0 : i32
    return %c0_i32, %c0_i32_0 : i32, i32
  }
  func.func @transform_7(%arg0: i32) -> (i32, i32) {
    %c0_i32 = arith.constant 0 : i32
    %c0_i32_0 = arith.constant 0 : i32
    return %arg0, %c0_i32 : i32, i32
  }
}

module attributes {stable_mosaic.version = 11 : i64} {
  func.func @nhits_block_kernel(%arg0: i32, %arg1: memref<16x128xf32, #tpu.memory_space<vmem>>, %arg2: memref<128x128xf32, #tpu.memory_space<vmem>>, %arg3: memref<1x128xf32, #tpu.memory_space<vmem>>, %arg4: memref<128x128xf32, #tpu.memory_space<vmem>>, %arg5: memref<1x128xf32, #tpu.memory_space<vmem>>, %arg6: memref<128x128xf32, #tpu.memory_space<vmem>>, %arg7: memref<1x128xf32, #tpu.memory_space<vmem>>, %arg8: memref<16x128xf32, #tpu.memory_space<vmem>>) attributes {dimension_semantics = [#tpu.dimension_semantics<parallel>], iteration_bounds = array<i64: 2>, scalar_prefetch = 0 : i64, scratch_operands = 0 : i64, tpu.core_type = #tpu.core_type<tc>, window_params = [{transform_indices = @transform_0, window_bounds = array<i64: 16, 128>}, {pipeline_mode = #tpu.pipeline_mode<synchronous>, transform_indices = @transform_1, window_bounds = array<i64: 128, 128>}, {pipeline_mode = #tpu.pipeline_mode<synchronous>, transform_indices = @transform_2, window_bounds = array<i64: 1, 128>}, {pipeline_mode = #tpu.pipeline_mode<synchronous>, transform_indices = @transform_3, window_bounds = array<i64: 128, 128>}, {pipeline_mode = #tpu.pipeline_mode<synchronous>, transform_indices = @transform_4, window_bounds = array<i64: 1, 128>}, {pipeline_mode = #tpu.pipeline_mode<synchronous>, transform_indices = @transform_5, window_bounds = array<i64: 128, 128>}, {pipeline_mode = #tpu.pipeline_mode<synchronous>, transform_indices = @transform_6, window_bounds = array<i64: 1, 128>}, {transform_indices = @transform_7, window_bounds = array<i64: 16, 128>}]} {
    %c0 = arith.constant 0 : index
    %c0_0 = arith.constant 0 : index
    %0 = vector.load %arg1[%c0, %c0_0] : memref<16x128xf32, #tpu.memory_space<vmem>>, vector<16x128xf32>
    %c127_i32 = arith.constant 127 : i32
    %1 = tpu.dynamic_rotate %0 by %c127_i32 dim 1 : vector<16x128xf32>, i32 -> vector<16x128xf32>
    %2 = arith.maximumf %0, %1 : vector<16x128xf32>
    %c126_i32 = arith.constant 126 : i32
    %3 = tpu.dynamic_rotate %2 by %c126_i32 dim 1 : vector<16x128xf32>, i32 -> vector<16x128xf32>
    %4 = arith.maximumf %2, %3 : vector<16x128xf32>
    %c0_1 = arith.constant 0 : index
    %c0_2 = arith.constant 0 : index
    %5 = vector.load %arg2[%c0_1, %c0_2] : memref<128x128xf32, #tpu.memory_space<vmem>>, vector<128x128xf32>
    %cst = arith.constant dense<0.000000e+00> : vector<16x128xf32>
    %6 = tpu.matmul %4, %5, %cst {dimension_numbers = #tpu.dot_dimension_numbers<[1], [0], [0], [1], [0, 0, 1, 1], [], []>} : vector<16x128xf32>, vector<128x128xf32>, vector<16x128xf32> -> vector<16x128xf32>
    %c0_3 = arith.constant 0 : index
    %c0_4 = arith.constant 0 : index
    %7 = vector.load %arg3[%c0_3, %c0_4] : memref<1x128xf32, #tpu.memory_space<vmem>>, vector<1x128xf32>
    %8 = vector.broadcast %7 : vector<1x128xf32> to vector<16x128xf32>
    %9 = arith.addf %6, %8 : vector<16x128xf32>
    %cst_5 = arith.constant 0.000000e+00 : f32
    %10 = vector.broadcast %cst_5 : f32 to vector<16x128xf32>
    %11 = arith.maximumf %9, %10 : vector<16x128xf32>
    %c0_6 = arith.constant 0 : index
    %c0_7 = arith.constant 0 : index
    %12 = vector.load %arg4[%c0_6, %c0_7] : memref<128x128xf32, #tpu.memory_space<vmem>>, vector<128x128xf32>
    %cst_8 = arith.constant dense<0.000000e+00> : vector<16x128xf32>
    %13 = tpu.matmul %11, %12, %cst_8 {dimension_numbers = #tpu.dot_dimension_numbers<[1], [0], [0], [1], [0, 0, 1, 1], [], []>} : vector<16x128xf32>, vector<128x128xf32>, vector<16x128xf32> -> vector<16x128xf32>
    %c0_9 = arith.constant 0 : index
    %c0_10 = arith.constant 0 : index
    %14 = vector.load %arg5[%c0_9, %c0_10] : memref<1x128xf32, #tpu.memory_space<vmem>>, vector<1x128xf32>
    %15 = vector.broadcast %14 : vector<1x128xf32> to vector<16x128xf32>
    %16 = arith.addf %13, %15 : vector<16x128xf32>
    %cst_11 = arith.constant 0.000000e+00 : f32
    %17 = vector.broadcast %cst_11 : f32 to vector<16x128xf32>
    %18 = arith.maximumf %16, %17 : vector<16x128xf32>
    %c0_12 = arith.constant 0 : index
    %c0_13 = arith.constant 0 : index
    %19 = vector.load %arg6[%c0_12, %c0_13] : memref<128x128xf32, #tpu.memory_space<vmem>>, vector<128x128xf32>
    %cst_14 = arith.constant dense<0.000000e+00> : vector<16x128xf32>
    %20 = tpu.matmul %18, %19, %cst_14 {dimension_numbers = #tpu.dot_dimension_numbers<[1], [0], [0], [1], [0, 0, 1, 1], [], []>} : vector<16x128xf32>, vector<128x128xf32>, vector<16x128xf32> -> vector<16x128xf32>
    %c0_15 = arith.constant 0 : index
    %c0_16 = arith.constant 0 : index
    %21 = vector.load %arg7[%c0_15, %c0_16] : memref<1x128xf32, #tpu.memory_space<vmem>>, vector<1x128xf32>
    %22 = vector.broadcast %21 : vector<1x128xf32> to vector<16x128xf32>
    %23 = arith.addf %20, %22 : vector<16x128xf32>
    %c0_17 = arith.constant 0 : index
    %c0_18 = arith.constant 0 : index
    %24 = vector.load %arg8[%c0_17, %c0_18] : memref<16x128xf32, #tpu.memory_space<vmem>>, vector<16x128xf32>
    tpu.vector_store %arg8[%c0_17, %c0_18], %23 {strides = array<i32>} : memref<16x128xf32, #tpu.memory_space<vmem>>, vector<16x128xf32>,
    return
  }
  func.func @transform_0(%arg0: i32) -> (i32, i32) {
    %c0_i32 = arith.constant 0 : i32
    %c0_i32_0 = arith.constant 0 : i32
    return %arg0, %c0_i32 : i32, i32
  }
  func.func @transform_1(%arg0: i32) -> (i32, i32) {
    %c0_i32 = arith.constant 0 : i32
    %c0_i32_0 = arith.constant 0 : i32
    %c0_i32_1 = arith.constant 0 : i32
    return %c0_i32, %c0_i32_0 : i32, i32
  }
  func.func @transform_2(%arg0: i32) -> (i32, i32) {
    %c0_i32 = arith.constant 0 : i32
    %c0_i32_0 = arith.constant 0 : i32
    %c0_i32_1 = arith.constant 0 : i32
    return %c0_i32, %c0_i32_0 : i32, i32
  }
  func.func @transform_3(%arg0: i32) -> (i32, i32) {
    %c0_i32 = arith.constant 0 : i32
    %c0_i32_0 = arith.constant 0 : i32
    %c0_i32_1 = arith.constant 0 : i32
    return %c0_i32, %c0_i32_0 : i32, i32
  }
  func.func @transform_4(%arg0: i32) -> (i32, i32) {
    %c0_i32 = arith.constant 0 : i32
    %c0_i32_0 = arith.constant 0 : i32
    %c0_i32_1 = arith.constant 0 : i32
    return %c0_i32, %c0_i32_0 : i32, i32
  }
  func.func @transform_5(%arg0: i32) -> (i32, i32) {
    %c0_i32 = arith.constant 0 : i32
    %c0_i32_0 = arith.constant 0 : i32
    %c0_i32_1 = arith.constant 0 : i32
    return %c0_i32, %c0_i32_0 : i32, i32
  }
  func.func @transform_6(%arg0: i32) -> (i32, i32) {
    %c0_i32 = arith.constant 0 : i32
    %c0_i32_0 = arith.constant 0 : i32
    %c0_i32_1 = arith.constant 0 : i32
    return %c0_i32, %c0_i32_0 : i32, i32
  }
  func.func @transform_7(%arg0: i32) -> (i32, i32) {
    %c0_i32 = arith.constant 0 : i32
    %c0_i32_0 = arith.constant 0 : i32
    return %arg0, %c0_i32 : i32, i32
  }
}

</mosaic_0001>

<llo_original>
// kernel: nhits_block.1
$region0: #{nhits_block.1}
  #allocation0 [shape = 'u32[]', space=smem, size = 0x4, offset = 0x4, fixed_abs, tag = 'smem constant byte address 0x4 - core index']
  #allocation1 [shape = 'u32[144,128]{1,0:T(1,128)}', space=vmem, size = 0x12000, scoped, tag = 'internal scratch']
  %s0 = inlined_call_operand.vmem [shape: f32[32,128], index: 0, kind: input, shape index: {}]
  %s1 = inlined_call_operand.hbm [shape: f32[128,128], index: 1, kind: input, shape index: {}]
  %s2 = inlined_call_operand.vmem [shape: f32[1,128], index: 2, kind: input, shape index: {}]
  %s3 = inlined_call_operand.hbm [shape: f32[128,128], index: 3, kind: input, shape index: {}]
  %s4 = inlined_call_operand.vmem [shape: f32[1,128], index: 4, kind: input, shape index: {}]
  %s5 = inlined_call_operand.vmem [shape: f32[128,128], index: 5, kind: input, shape index: {}]
  %s6 = inlined_call_operand.vmem [shape: f32[1,128], index: 6, kind: input, shape index: {}]
  %s7 = inlined_call_operand.vmem [shape: f32[32,128], index: 7, kind: output, shape index: {}]
  %s8 = sld [smem:[#allocation0]]
  $region69: #{nhits_block.1} parent=0
    _
  %s10 = ssub.s32 1, %s8
  %s11 = scalar_select 0, %s10, %s8
  $region1: #{nhits_block.1} parent=0
    #allocation2 [shape = 'u8[65536]{0}', space=vmem, size = 0x10000, scoped, tag = 'input window, operand 1, single buffered']
    #allocation3 [shape = 's32[2]{0}', space=sflag, size = 0x8, scoped, tag = 'scoped memory for nhits_block.1']
    #allocation4 [shape = 'u8[65536]{0}', space=vmem, size = 0x10000, scoped, tag = 'input window, operand 3, single buffered']
    #allocation5 [shape = 's32[1]{0}', space=sflag, size = 0x4, scoped, tag = 'scoped memory for nhits_block.1']
    %12 = vsyncpa [#allocation3], 0
    %13 = vsyncpa [#allocation5], 0
    loop: start=0, step=1, limit=4
    $region2: #{nhits_block.1} parent=1 // loop_pre_header
      _
    $region3: #{nhits_block.1} parent=1 // loop_header
      %s15 = sphi 0, %s19
      %p16 = scmp.ge.s32.totalorder %s15, 4
      %s25 = sphi 0, %s27
      %s28 = sphi 0, %s25
      %s29 = sphi 0, %s28
      %s45 = sphi 0, %s29
      %s49 = sphi 0, %s49
      %s51 = sphi 0, %s49
      %s52 = sphi 0, %s51
      %s66 = sphi 0, %s52
      %s70 = sphi 0, %s70
      %s72 = sphi 0, %s70
      %s73 = sphi 0, %s72
      %s87 = sphi 0, %s73
      %s91 = sphi 0, %s91
      %s93 = sphi 0, %s91
      %s94 = sphi 0, %s93
      %s108 = sphi 0, %s94
      %s112 = sphi 0, %s112
      %s114 = sphi 0, %s112
      %s115 = sphi 0, %s114
      %s129 = sphi 0, %s115
      %s133 = sphi 0, %s133
      %s135 = sphi 0, %s133
      %s136 = sphi 0, %s135
      %s150 = sphi 0, %s136
      %s154 = sphi 0, %s154
      %s156 = sphi 0, %s154
      %s157 = sphi 0, %s156
      %s171 = sphi 0, %s157
      %s177 = sphi 0, %s179
      %s180 = sphi 0, %s177
      %s181 = sphi 0, %s180
      %s197 = sphi 0, %s181
    $region4: #{nhits_block.1} parent=1 // loop_header_branch
      %18 = sbr.rel (%p16) target = $region8
    $region5: #{nhits_block.1} parent=1 // loop_body
      %s20 = ssub.s32 %s15, 1
      %s21 = ssub.s32 %s15, 2
      %s22 = sadd.s32 %s15, 1
      %s23 = ssub.s32 %s15, %s22
      %p24 = scmp.eq.s32.totalorder %s23, 0
      %s26 = sadd.s32 %s25, 1
      %s27 = scalar_select %p24, %s25, %s26
      %p30 = pneg %p24
      %p31 = scmp.eq.s32.totalorder %s15, 1
      %p32 = por %p30, %p31
      %p33 = scmp.ne.s32.totalorder %s25, %s28
      %p34 = scmp.eq.s32.totalorder %s15, 0
      %p35 = por %p33, %p34
      %p36 = scmp.ne.s32.totalorder %s25, %s28
      %p37 = scmp.eq.s32.totalorder %s20, 1
      %p38 = por %p36, %p37
      %p39 = scmp.ne.s32.totalorder %s28, %s29
      %p40 = scmp.eq.s32.totalorder %s20, 0
      %p41 = por %p39, %p40
      %p42 = scmp.ne.s32.totalorder %s28, %s29
      %p43 = scmp.eq.s32.totalorder %s21, 1
      %p44 = por %p42, %p43
      %p46 = scmp.ne.s32.totalorder %s29, %s45
      %p47 = scmp.eq.s32.totalorder %s21, 0
      %p48 = por %p46, %p47
      %s50 = sadd.s32 %s49, 1
      %p53 = scmp.eq.s32.totalorder %s15, 1
      %p54 = scmp.ne.s32.totalorder %s49, %s51
      %p55 = scmp.eq.s32.totalorder %s15, 0
      %p56 = por %p54, %p55
      %p57 = scmp.ne.s32.totalorder %s49, %s51
      %p58 = scmp.eq.s32.totalorder %s20, 1
      %p59 = por %p57, %p58
      %p60 = scmp.ne.s32.totalorder %s51, %s52
      %p61 = scmp.eq.s32.totalorder %s20, 0
      %p62 = por %p60, %p61
      %p63 = scmp.ne.s32.totalorder %s51, %s52
      %p64 = scmp.eq.s32.totalorder %s21, 1
      %p65 = por %p63, %p64
      %p67 = scmp.ne.s32.totalorder %s52, %s66
      %p68 = scmp.eq.s32.totalorder %s21, 0
      %p69 = por %p67, %p68
      %s71 = sadd.s32 %s70, 1
      %p74 = scmp.eq.s32.totalorder %s15, 1
      %p75 = scmp.ne.s32.totalorder %s70, %s72
      %p76 = scmp.eq.s32.totalorder %s15, 0
      %p77 = por %p75, %p76
      %p78 = scmp.ne.s32.totalorder %s70, %s72
      %p79 = scmp.eq.s32.totalorder %s20, 1
      %p80 = por %p78, %p79
      %p81 = scmp.ne.s32.totalorder %s72, %s73
      %p82 = scmp.eq.s32.totalorder %s20, 0
      %p83 = por %p81, %p82
      %p84 = scmp.ne.s32.totalorder %s72, %s73
      %p85 = scmp.eq.s32.totalorder %s21, 1
      %p86 = por %p84, %p85
      %p88 = scmp.ne.s32.totalorder %s73, %s87
      %p89 = scmp.eq.s32.totalorder %s21, 0
      %p90 = por %p88, %p89
      %s92 = sadd.s32 %s91, 1
      %p95 = scmp.eq.s32.totalorder %s15, 1
      %p96 = scmp.ne.s32.totalorder %s91, %s93
      %p97 = scmp.eq.s32.totalorder %s15, 0
      %p98 = por %p96, %p97
      %p99 = scmp.ne.s32.totalorder %s91, %s93
      %p100 = scmp.eq.s32.totalorder %s20, 1
      %p101 = por %p99, %p100
      %p102 = scmp.ne.s32.totalorder %s93, %s94
      %p103 = scmp.eq.s32.totalorder %s20, 0
      %p104 = por %p102, %p103
      %p105 = scmp.ne.s32.totalorder %s93, %s94
      %p106 = scmp.eq.s32.totalorder %s21, 1
      %p107 = por %p105, %p106
      %p109 = scmp.ne.s32.totalorder %s94, %s108
      %p110 = scmp.eq.s32.totalorder %s21, 0
      %p111 = por %p109, %p110
      %s113 = sadd.s32 %s112, 1
      %p116 = scmp.eq.s32.totalorder %s15, 1
      %p117 = scmp.ne.s32.totalorder %s112, %s114
      %p118 = scmp.eq.s32.totalorder %s15, 0
      %p119 = por %p117, %p118
      %p120 = scmp.ne.s32.totalorder %s112, %s114
      %p121 = scmp.eq.s32.totalorder %s20, 1
      %p122 = por %p120, %p121
      %p123 = scmp.ne.s32.totalorder %s114, %s115
      %p124 = scmp.eq.s32.totalorder %s20, 0
      %p125 = por %p123, %p124
      %p126 = scmp.ne.s32.totalorder %s114, %s115
      %p127 = scmp.eq.s32.totalorder %s21, 1
      %p128 = por %p126, %p127
      %p130 = scmp.ne.s32.totalorder %s115, %s129
      %p131 = scmp.eq.s32.totalorder %s21, 0
      %p132 = por %p130, %p131
      %s134 = sadd.s32 %s133, 1
      %p137 = scmp.eq.s32.totalorder %s15, 1
      %p138 = scmp.ne.s32.totalorder %s133, %s135
      %p139 = scmp.eq.s32.totalorder %s15, 0
      %p140 = por %p138, %p139
      %p141 = scmp.ne.s32.totalorder %s133, %s135
      %p142 = scmp.eq.s32.totalorder %s20, 1
      %p143 = por %p141, %p142
      %p144 = scmp.ne.s32.totalorder %s135, %s136
      %p145 = scmp.eq.s32.totalorder %s20, 0
      %p146 = por %p144, %p145
      %p147 = scmp.ne.s32.totalorder %s135, %s136
      %p148 = scmp.eq.s32.totalorder %s21, 1
      %p149 = por %p147, %p148
      %p151 = scmp.ne.s32.totalorder %s136, %s150
      %p152 = scmp.eq.s32.totalorder %s21, 0
      %p153 = por %p151, %p152
      %s155 = sadd.s32 %s154, 1
      %p158 = scmp.eq.s32.totalorder %s15, 1
      %p159 = scmp.ne.s32.totalorder %s154, %s156
      %p160 = scmp.eq.s32.totalorder %s15, 0
      %p161 = por %p159, %p160
      %p162 = scmp.ne.s32.totalorder %s154, %s156
      %p163 = scmp.eq.s32.totalorder %s20, 1
      %p164 = por %p162, %p163
      %p165 = scmp.ne.s32.totalorder %s156, %s157
      %p166 = scmp.eq.s32.totalorder %s20, 0
      %p167 = por %p165, %p166
      %p168 = scmp.ne.s32.totalorder %s156, %s157
      %p169 = scmp.eq.s32.totalorder %s21, 1
      %p170 = por %p168, %p169
      %p172 = scmp.ne.s32.totalorder %s157, %s171
      %p173 = scmp.eq.s32.totalorder %s21, 0
      %p174 = por %p172, %p173
      %s175 = ssub.s32 %s15, %s22
      %p176 = scmp.eq.s32.totalorder %s175, 0
      %s178 = sadd.s32 %s177, 1
      %s179 = scalar_select %p176, %s177, %s178
      %p182 = pneg %p176
      %p183 = scmp.eq.s32.totalorder %s15, 1
      %p184 = por %p182, %p183
      %p185 = scmp.ne.s32.totalorder %s177, %s180
      %p186 = scmp.eq.s32.totalorder %s15, 0
      %p187 = por %p185, %p186
      %p188 = scmp.ne.s32.totalorder %s177, %s180
      %p189 = scmp.eq.s32.totalorder %s20, 1
      %p190 = por %p188, %p189
      %p191 = scmp.ne.s32.totalorder %s180, %s181
      %p192 = scmp.eq.s32.totalorder %s20, 0
      %p193 = por %p191, %p192
      %p194 = scmp.ne.s32.totalorder %s180, %s181
      %p195 = scmp.eq.s32.totalorder %s21, 1
      %p196 = por %p194, %p195
      %p198 = scmp.ne.s32.totalorder %s181, %s197
      %p199 = scmp.eq.s32.totalorder %s21, 0
      %p200 = por %p198, %p199
      %p201 = scmp.le.s32.totalorder 1, %s15
      %p202 = scmp.lt.s32.totalorder %s15, 3
      %p203 = pnand %p201, %p202
      %p204 = pneg %p203
      // Predicated region
      $region9: #{nhits_block.1} parent=5 // pred_check
        _
      $region10: #{nhits_block.1} parent=5 // pred_check_branch
        %206 = sbr.rel (%p203) target = $region12
      $region11: #{nhits_block.1} parent=5 // pred_region
        %s207 = ssub.s32 %s15, 1
        // Predicated region
        $region13: #{nhits_block.1} parent=11 // pred_check
          %p208 = pneg %p62
        $region14: #{nhits_block.1} parent=11 // pred_check_branch
          %210 = sbr.rel (%p208) target = $region16
        $region15: #{nhits_block.1} parent=11 // pred_region
          %s212 = ssub.s32 2048, 2048
          %213 = vsyncadd [#allocation3], %s212
          %s214 = sshll.u32 [#allocation2], 4
          %s215 = int_to_ptr.vmem [resolvable:$true] %s214
          %220 = dma.hbm_to_vmem [thread:$0]  %s1, 2048, %s215, [#allocation3], 128, 128, 8
        $region16: #{nhits_block.1} parent=11 // pred_fallthru
          _
        // Predicated region
        $region17: #{nhits_block.1} parent=11 // pred_check
          %p221 = pneg %p83
        $region18: #{nhits_block.1} parent=11 // pred_check_branch
          %223 = sbr.rel (%p221) target = $region20
        $region19: #{nhits_block.1} parent=11 // pred_region
          _
        $region20: #{nhits_block.1} parent=11 // pred_fallthru
          _
        // Predicated region
        $region21: #{nhits_block.1} parent=11 // pred_check
          %p224 = pneg %p104
        $region22: #{nhits_block.1} parent=11 // pred_check_branch
          %226 = sbr.rel (%p224) target = $region24
        $region23: #{nhits_block.1} parent=11 // pred_region
          %s228 = ssub.s32 2048, 2048
          %229 = vsyncadd [#allocation5], %s228
          %s230 = sshll.u32 [#allocation4], 4
          %s231 = int_to_ptr.vmem [resolvable:$true] %s230
          %236 = dma.hbm_to_vmem [thread:$0]  %s3, 2048, %s231, [#allocation5], 128, 128, 8
        $region24: #{nhits_block.1} parent=11 // pred_fallthru
          _
        // Predicated region
        $region25: #{nhits_block.1} parent=11 // pred_check
          %p237 = pneg %p125
        $region26: #{nhits_block.1} parent=11 // pred_check_branch
          %239 = sbr.rel (%p237) target = $region28
        $region27: #{nhits_block.1} parent=11 // pred_region
          _
        $region28: #{nhits_block.1} parent=11 // pred_fallthru
          _
        // Predicated region
        $region29: #{nhits_block.1} parent=11 // pred_check
          %p240 = pneg %p146
        $region30: #{nhits_block.1} parent=11 // pred_check_branch
          %242 = sbr.rel (%p240) target = $region32
        $region31: #{nhits_block.1} parent=11 // pred_region
          _
        $region32: #{nhits_block.1} parent=11 // pred_fallthru
          _
        // Predicated region
        $region33: #{nhits_block.1} parent=11 // pred_check
          %p243 = pneg %p167
        $region34: #{nhits_block.1} parent=11 // pred_check_branch
          %245 = sbr.rel (%p243) target = $region36
        $region35: #{nhits_block.1} parent=11 // pred_region
          _
        $region36: #{nhits_block.1} parent=11 // pred_fallthru
          _
      $region12: #{nhits_block.1} parent=5 // pred_fallthru
        _
      %p246 = scmp.lt.s32.totalorder %s15, 2
      // Predicated region
      $region37: #{nhits_block.1} parent=5 // pred_check
        %p247 = pneg %p246
      $region38: #{nhits_block.1} parent=5 // pred_check_branch
        %249 = sbr.rel (%p247) target = $region40
      $region39: #{nhits_block.1} parent=5 // pred_region
        // Predicated region
        $region41: #{nhits_block.1} parent=39 // pred_check
          %p250 = pneg %p35
        $region42: #{nhits_block.1} parent=39 // pred_check_branch
          %252 = sbr.rel (%p250) target = $region44
        $region43: #{nhits_block.1} parent=39 // pred_region
          %s253 = smul.u32 2, %s15
          %p254 = scmp.lt.s32.totalorder %s253, 3
          %s255 = scalar_select %p254, %s253, 3
          %s256 = smul.addr %s255, 8
          %s257 = scalar_lea.vmem %s0, %s256
          %s258 = smul.u32 2, %s15
        $region44: #{nhits_block.1} parent=39 // pred_fallthru
          _
      $region40: #{nhits_block.1} parent=5 // pred_fallthru
        _
      %p259 = scmp.le.s32.totalorder 1, %s15
      %p260 = scmp.lt.s32.totalorder %s15, 3
      %p261 = pnand %p259, %p260
      %p262 = pneg %p261
      // Predicated region
      $region45: #{nhits_block.1} parent=5 // pred_check
        _
      $region46: #{nhits_block.1} parent=5 // pred_check_branch
        %264 = sbr.rel (%p261) target = $region48
      $region47: #{nhits_block.1} parent=5 // pred_region
        %s265 = ssub.s32 %s15, 1
        // Predicated region
        $region49: #{nhits_block.1} parent=47 // pred_check
          %p266 = pneg %p62
        $region50: #{nhits_block.1} parent=47 // pred_check_branch
          %268 = sbr.rel (%p266) target = $region52
        $region51: #{nhits_block.1} parent=47 // pred_region
          %269 = dma.done [#allocation3], 2048
        $region52: #{nhits_block.1} parent=47 // pred_fallthru
          _
        // Predicated region
        $region53: #{nhits_block.1} parent=47 // pred_check
          %p270 = pneg %p104
        $region54: #{nhits_block.1} parent=47 // pred_check_branch
          %272 = sbr.rel (%p270) target = $region56
        $region55: #{nhits_block.1} parent=47 // pred_region
          %273 = dma.done [#allocation5], 2048
        $region56: #{nhits_block.1} parent=47 // pred_fallthru
          _
        %s274 = smul.u32 2, %s20
        %p275 = scmp.lt.s32.totalorder %s274, 3
        %s276 = scalar_select %p275, %s274, 3
        %s277 = smul.addr %s276, 8
        %s278 = scalar_lea.vmem %s0, %s277
        %p279 = pneg %p41
        %p280 = pneg %p38
        %p281 = pneg %p62
        %p282 = pneg %p59
        %p283 = pneg %p83
        %p284 = pneg %p80
        %p285 = pneg %p104
        %p286 = pneg %p101
        %p287 = pneg %p125
        %p288 = pneg %p122
        %p289 = pneg %p146
        %p290 = pneg %p143
        %p291 = pneg %p167
        %p292 = pneg %p164
        %p293 = pneg %p193
        %p294 = pneg %p190
        %s295 = smul.u32 2, %s20
        %p296 = scmp.lt.s32.totalorder %s295, 3
        %s297 = scalar_select %p296, %s295, 3
        %s298 = smul.addr %s297, 8
        %s299 = scalar_lea.vmem %s7, %s298
        %s300 = smul.u32 2, %s20
        %p301 = scmp.lt.s32.totalorder %s300, 3
        %s302 = scalar_select %p301, %s300, 3
        %s303 = smul.addr %s302, 8
        %s304 = scalar_lea.vmem %s0, %s303
        %s305 = smul.u32 2, %s20
        %s306 = smul.u32 2, %s20
        %p307 = scmp.lt.s32.totalorder %s306, 3
        %s308 = scalar_select %p307, %s306, 3
        %s309 = smul.addr %s308, 8
        %s310 = scalar_lea.vmem %s7, %s309
        %s311 = smul.u32 2, %s20
        %v312 = vld [vmem:[%s304] sm:$0xff]
        %v313 = vld [vmem:[%s304 + $0x8] sm:$0xff]
        %314 = vrot.lane.b32.xlu0 %v312, 127
        %v315 = vpop.permute.xlu0 %314
        %316 = vrot.lane.b32.xlu0 %v313, 127
        %v317 = vpop.permute.xlu0 %316
        %v318 = vmax.f32 %v312, %v315
        %v319 = vmax.f32 %v313, %v317
        %320 = vrot.lane.b32.xlu0 %v318, 126
        %v321 = vpop.permute.xlu0 %320
        %322 = vrot.lane.b32.xlu0 %v319, 126
        %v323 = vpop.permute.xlu0 %322
        %v324 = vmax.f32 %v318, %v321
        %v325 = vmax.f32 %v319, %v323
        %v326 = vld [vmem:[#allocation2] sm:$0xff]
        %v327 = vld [vmem:[#allocation2 + $0x8] sm:$0xff]
        %v328 = vld [vmem:[#allocation2 + $0x10] sm:$0xff]
        %v329 = vld [vmem:[#allocation2 + $0x18] sm:$0xff]
        %v330 = vld [vmem:[#allocation2 + $0x20] sm:$0xff]
        %v331 = vld [vmem:[#allocation2 + $0x28] sm:$0xff]
        %v332 = vld [vmem:[#allocation2 + $0x30] sm:$0xff]
        %v333 = vld [vmem:[#allocation2 + $0x38] sm:$0xff]
        %v334 = vld [vmem:[#allocation2 + $0x40] sm:$0xff]
        %v335 = vld [vmem:[#allocation2 + $0x48] sm:$0xff]
        %v336 = vld [vmem:[#allocation2 + $0x50] sm:$0xff]
        %v337 = vld [vmem:[#allocation2 + $0x58] sm:$0xff]
        %v338 = vld [vmem:[#allocation2 + $0x60] sm:$0xff]
        %v339 = vld [vmem:[#allocation2 + $0x68] sm:$0xff]
        %v340 = vld [vmem:[#allocation2 + $0x70] sm:$0xff]
        %v341 = vld [vmem:[#allocation2 + $0x78] sm:$0xff]
        %v342 = vld [vmem:[%s2] sm:$0x1]
        %v344 = vlaneseq
        %v345 = vshrl.u32 %v344, 7
        %v346 = vsub.s32 0, %v345
        %v347 = vrot.slane %v342, %v346
        %349 = vmatprep.subr.mxu0 0.0
        %350 = vmatpush1.msra.mxu0 %v341
        %351 = vmatprep.subr.mxu0 0.0
        %352 = vmatpush1.msra.mxu0 %v340
        %353 = vmatprep.subr.mxu0 0.0
        %354 = vmatpush1.msra.mxu0 %v339
        %355 = vmatprep.subr.mxu0 0.0
        %356 = vmatpush1.msra.mxu0 %v338
        %357 = vmatprep.subr.mxu0 0.0
        %358 = vmatpush1.msra.mxu0 %v337
        %359 = vmatprep.subr.mxu0 0.0
        %360 = vmatpush1.msra.mxu0 %v336
        %361 = vmatprep.subr.mxu0 0.0
        %362 = vmatpush1.msra.mxu0 %v335
        %363 = vmatprep.subr.mxu0 0.0
        %364 = vmatpush1.msra.mxu0 %v334
        %365 = vmatprep.subr.mxu0 0.0
        %366 = vmatpush1.msra.mxu0 %v333
        %367 = vmatprep.subr.mxu0 0.0
        %368 = vmatpush1.msra.mxu0 %v332
        %369 = vmatprep.subr.mxu0 0.0
        %370 = vmatpush1.msra.mxu0 %v331
        %371 = vmatprep.subr.mxu0 0.0
        %372 = vmatpush1.msra.mxu0 %v330
        %373 = vmatprep.subr.mxu0 0.0
        %374 = vmatpush1.msra.mxu0 %v329
        %375 = vmatprep.subr.mxu0 0.0
        %376 = vmatpush1.msra.mxu0 %v328
        %377 = vmatprep.subr.mxu0 0.0
        %378 = vmatpush1.msra.mxu0 %v327
        %379 = vmatprep.subr.mxu0 0.0
        %380 = vmatpush1.msra.mxu0 %v326
        %381 = vmatprep.subr.mxu0 0.0
        %382 = vmatpush2.msra.mxu0 0.0
        %383 = vmatprep.subr.mxu0 0.0
        %384 = vmatpush2.msra.mxu0 0.0
        %385 = vmatprep.subr.mxu0 0.0
        %386 = vmatpush2.msra.mxu0 0.0
        %387 = vmatprep.subr.mxu0 0.0
        %388 = vmatpush2.msra.mxu0 0.0
        %389 = vmatprep.subr.mxu0 0.0
        %390 = vmatpush2.msra.mxu0 0.0
        %391 = vmatprep.subr.mxu0 0.0
        %392 = vmatpush2.msra.mxu0 0.0
        %393 = vmatprep.subr.mxu0 0.0
        %394 = vmatpush2.msra.mxu0 0.0
        %395 = vmatprep.subr.mxu0 0.0
        %396 = vmatpush2.msra.mxu0 0.0
        %397 = vmatprep.subr.mxu0 0.0
        %398 = vmatpush2.msra.mxu0 0.0
        %399 = vmatprep.subr.mxu0 0.0
        %400 = vmatpush2.msra.mxu0 0.0
        %401 = vmatprep.subr.mxu0 0.0
        %402 = vmatpush2.msra.mxu0 0.0
        %403 = vmatprep.subr.mxu0 0.0
        %404 = vmatpush2.msra.mxu0 0.0
        %405 = vmatprep.subr.mxu0 0.0
        %406 = vmatpush2.msra.mxu0 0.0
        %407 = vmatprep.subr.mxu0 0.0
        %408 = vmatpush2.msra.mxu0 0.0
        %409 = vmatprep.subr.mxu0 0.0
        %410 = vmatpush2.msra.mxu0 0.0
        %411 = vmatprep.subr.mxu0 0.0
        %412 = vmatpush2.msra.mxu0 0.0
        %413 = vmatprep.mubr.f32.mxu0 0.0
        %414 = vmatmul.mubr.f32.gmra.mxu0 %v324
        %v415 = vpop.f32.mrf.mxu0
        %v416 = vadd.f32 %v347, %v415
        %v417 = vpop.f32.mrf.mxu0
        %418 = vmatprep.mubr.f32.mxu0 0.0
        %419 = vmatmul.mubr.f32.gmra.mxu0 %v325
        %v420 = vpop.f32.mrf.mxu0
        %v421 = vadd.f32 %v347, %v420
        %v422 = vpop.f32.mrf.mxu0
        %423 = vdwg.mxu0
        %v424 = vmax.f32 %v416, 0.0
        %v425 = vmax.f32 %v421, 0.0
        %v426 = vld [vmem:[#allocation4] sm:$0xff]
        %v427 = vld [vmem:[#allocation4 + $0x8] sm:$0xff]
        %v428 = vld [vmem:[#allocation4 + $0x10] sm:$0xff]
        %v429 = vld [vmem:[#allocation4 + $0x18] sm:$0xff]
        %v430 = vld [vmem:[#allocation4 + $0x20] sm:$0xff]
        %v431 = vld [vmem:[#allocation4 + $0x28] sm:$0xff]
        %v432 = vld [vmem:[#allocation4 + $0x30] sm:$0xff]
        %v433 = vld [vmem:[#allocation4 + $0x38] sm:$0xff]
        %v434 = vld [vmem:[#allocation4 + $0x40] sm:$0xff]
        %v435 = vld [vmem:[#allocation4 + $0x48] sm:$0xff]
        %v436 = vld [vmem:[#allocation4 + $0x50] sm:$0xff]
        %v437 = vld [vmem:[#allocation4 + $0x58] sm:$0xff]
        %v438 = vld [vmem:[#allocation4 + $0x60] sm:$0xff]
        %v439 = vld [vmem:[#allocation4 + $0x68] sm:$0xff]
        %v440 = vld [vmem:[#allocation4 + $0x70] sm:$0xff]
        %v441 = vld [vmem:[#allocation4 + $0x78] sm:$0xff]
        %v442 = vld [vmem:[%s4] sm:$0x1]
        %v444 = vlaneseq
        %v445 = vshrl.u32 %v444, 7
        %v446 = vsub.s32 0, %v445
        %v447 = vrot.slane %v442, %v446
        %449 = vmatprep.subr.mxu0 0.0
        %450 = vmatpush1.msra.mxu0 %v441
        %451 = vmatprep.subr.mxu0 0.0
        %452 = vmatpush1.msra.mxu0 %v440
        %453 = vmatprep.subr.mxu0 0.0
        %454 = vmatpush1.msra.mxu0 %v439
        %455 = vmatprep.subr.mxu0 0.0
        %456 = vmatpush1.msra.mxu0 %v438
        %457 = vmatprep.subr.mxu0 0.0
        %458 = vmatpush1.msra.mxu0 %v437
        %459 = vmatprep.subr.mxu0 0.0
        %460 = vmatpush1.msra.mxu0 %v436
        %461 = vmatprep.subr.mxu0 0.0
        %462 = vmatpush1.msra.mxu0 %v435
        %463 = vmatprep.subr.mxu0 0.0
        %464 = vmatpush1.msra.mxu0 %v434
        %465 = vmatprep.subr.mxu0 0.0
        %466 = vmatpush1.msra.mxu0 %v433
        %467 = vmatprep.subr.mxu0 0.0
        %468 = vmatpush1.msra.mxu0 %v432
        %469 = vmatprep.subr.mxu0 0.0
        %470 = vmatpush1.msra.mxu0 %v431
        %471 = vmatprep.subr.mxu0 0.0
        %472 = vmatpush1.msra.mxu0 %v430
        %473 = vmatprep.subr.mxu0 0.0
        %474 = vmatpush1.msra.mxu0 %v429
        %475 = vmatprep.subr.mxu0 0.0
        %476 = vmatpush1.msra.mxu0 %v428
        %477 = vmatprep.subr.mxu0 0.0
        %478 = vmatpush1.msra.mxu0 %v427
        %479 = vmatprep.subr.mxu0 0.0
        %480 = vmatpush1.msra.mxu0 %v426
        %481 = vmatprep.subr.mxu0 0.0
        %482 = vmatpush2.msra.mxu0 0.0
        %483 = vmatprep.subr.mxu0 0.0
        %484 = vmatpush2.msra.mxu0 0.0
        %485 = vmatprep.subr.mxu0 0.0
        %486 = vmatpush2.msra.mxu0 0.0
        %487 = vmatprep.subr.mxu0 0.0
        %488 = vmatpush2.msra.mxu0 0.0
        %489 = vmatprep.subr.mxu0 0.0
        %490 = vmatpush2.msra.mxu0 0.0
        %491 = vmatprep.subr.mxu0 0.0
        %492 = vmatpush2.msra.mxu0 0.0
        %493 = vmatprep.subr.mxu0 0.0
        %494 = vmatpush2.msra.mxu0 0.0
        %495 = vmatprep.subr.mxu0 0.0
        %496 = vmatpush2.msra.mxu0 0.0
        %497 = vmatprep.subr.mxu0 0.0
        %498 = vmatpush2.msra.mxu0 0.0
        %499 = vmatprep.subr.mxu0 0.0
        %500 = vmatpush2.msra.mxu0 0.0
        %501 = vmatprep.subr.mxu0 0.0
        %502 = vmatpush2.msra.mxu0 0.0
        %503 = vmatprep.subr.mxu0 0.0
        %504 = vmatpush2.msra.mxu0 0.0
        %505 = vmatprep.subr.mxu0 0.0
        %506 = vmatpush2.msra.mxu0 0.0
        %507 = vmatprep.subr.mxu0 0.0
        %508 = vmatpush2.msra.mxu0 0.0
        %509 = vmatprep.subr.mxu0 0.0
        %510 = vmatpush2.msra.mxu0 0.0
        %511 = vmatprep.subr.mxu0 0.0
        %512 = vmatpush2.msra.mxu0 0.0
        %513 = vmatprep.mubr.f32.mxu0 0.0
        %514 = vmatmul.mubr.f32.gmra.mxu0 %v424
        %v515 = vpop.f32.mrf.mxu0
        %v516 = vadd.f32 %v447, %v515
        %v517 = vpop.f32.mrf.mxu0
        %518 = vmatprep.mubr.f32.mxu0 0.0
        %519 = vmatmul.mubr.f32.gmra.mxu0 %v425
        %v520 = vpop.f32.mrf.mxu0
        %v521 = vadd.f32 %v447, %v520
        %v522 = vpop.f32.mrf.mxu0
        %523 = vdwg.mxu0
        %v524 = vmax.f32 %v516, 0.0
        %v525 = vmax.f32 %v521, 0.0
        %v526 = vld [vmem:[%s5] sm:$0xff]
        %v527 = vld [vmem:[%s5 + $0x8] sm:$0xff]
        %v528 = vld [vmem:[%s5 + $0x10] sm:$0xff]
        %v529 = vld [vmem:[%s5 + $0x18] sm:$0xff]
        %v530 = vld [vmem:[%s5 + $0x20] sm:$0xff]
        %v531 = vld [vmem:[%s5 + $0x28] sm:$0xff]
        %v532 = vld [vmem:[%s5 + $0x30] sm:$0xff]
        %v533 = vld [vmem:[%s5 + $0x38] sm:$0xff]
        %v534 = vld [vmem:[%s5 + $0x40] sm:$0xff]
        %v535 = vld [vmem:[%s5 + $0x48] sm:$0xff]
        %v536 = vld [vmem:[%s5 + $0x50] sm:$0xff]
        %v537 = vld [vmem:[%s5 + $0x58] sm:$0xff]
        %v538 = vld [vmem:[%s5 + $0x60] sm:$0xff]
        %v539 = vld [vmem:[%s5 + $0x68] sm:$0xff]
        %v540 = vld [vmem:[%s5 + $0x70] sm:$0xff]
        %v541 = vld [vmem:[%s5 + $0x78] sm:$0xff]
        %v542 = vld [vmem:[%s6] sm:$0x1]
        %v544 = vlaneseq
        %v545 = vshrl.u32 %v544, 7
        %v546 = vsub.s32 0, %v545
        %v547 = vrot.slane %v542, %v546
        %549 = vmatprep.subr.mxu0 0.0
        %550 = vmatpush1.msra.mxu0 %v541
        %551 = vmatprep.subr.mxu0 0.0
        %552 = vmatpush1.msra.mxu0 %v540
        %553 = vmatprep.subr.mxu0 0.0
        %554 = vmatpush1.msra.mxu0 %v539
        %555 = vmatprep.subr.mxu0 0.0
        %556 = vmatpush1.msra.mxu0 %v538
        %557 = vmatprep.subr.mxu0 0.0
        %558 = vmatpush1.msra.mxu0 %v537
        %559 = vmatprep.subr.mxu0 0.0
        %560 = vmatpush1.msra.mxu0 %v536
        %561 = vmatprep.subr.mxu0 0.0
        %562 = vmatpush1.msra.mxu0 %v535
        %563 = vmatprep.subr.mxu0 0.0
        %564 = vmatpush1.msra.mxu0 %v534
        %565 = vmatprep.subr.mxu0 0.0
        %566 = vmatpush1.msra.mxu0 %v533
        %567 = vmatprep.subr.mxu0 0.0
        %568 = vmatpush1.msra.mxu0 %v532
        %569 = vmatprep.subr.mxu0 0.0
        %570 = vmatpush1.msra.mxu0 %v531
        %571 = vmatprep.subr.mxu0 0.0
        %572 = vmatpush1.msra.mxu0 %v530
        %573 = vmatprep.subr.mxu0 0.0
        %574 = vmatpush1.msra.mxu0 %v529
        %575 = vmatprep.subr.mxu0 0.0
        %576 = vmatpush1.msra.mxu0 %v528
        %577 = vmatprep.subr.mxu0 0.0
        %578 = vmatpush1.msra.mxu0 %v527
        %579 = vmatprep.subr.mxu0 0.0
        %580 = vmatpush1.msra.mxu0 %v526
        %581 = vmatprep.subr.mxu0 0.0
        %582 = vmatpush2.msra.mxu0 0.0
        %583 = vmatprep.subr.mxu0 0.0
        %584 = vmatpush2.msra.mxu0 0.0
        %585 = vmatprep.subr.mxu0 0.0
        %586 = vmatpush2.msra.mxu0 0.0
        %587 = vmatprep.subr.mxu0 0.0
        %588 = vmatpush2.msra.mxu0 0.0
        %589 = vmatprep.subr.mxu0 0.0
        %590 = vmatpush2.msra.mxu0 0.0
        %591 = vmatprep.subr.mxu0 0.0
        %592 = vmatpush2.msra.mxu0 0.0
        %593 = vmatprep.subr.mxu0 0.0
        %594 = vmatpush2.msra.mxu0 0.0
        %595 = vmatprep.subr.mxu0 0.0
        %596 = vmatpush2.msra.mxu0 0.0
        %597 = vmatprep.subr.mxu0 0.0
        %598 = vmatpush2.msra.mxu0 0.0
        %599 = vmatprep.subr.mxu0 0.0
        %600 = vmatpush2.msra.mxu0 0.0
        %601 = vmatprep.subr.mxu0 0.0
        %602 = vmatpush2.msra.mxu0 0.0
        %603 = vmatprep.subr.mxu0 0.0
        %604 = vmatpush2.msra.mxu0 0.0
        %605 = vmatprep.subr.mxu0 0.0
        %606 = vmatpush2.msra.mxu0 0.0
        %607 = vmatprep.subr.mxu0 0.0
        %608 = vmatpush2.msra.mxu0 0.0
        %609 = vmatprep.subr.mxu0 0.0
        %610 = vmatpush2.msra.mxu0 0.0
        %611 = vmatprep.subr.mxu0 0.0
        %612 = vmatpush2.msra.mxu0 0.0
        %613 = vmatprep.mubr.f32.mxu0 0.0
        %614 = vmatmul.mubr.f32.gmra.mxu0 %v524
        %v615 = vpop.f32.mrf.mxu0
        %v616 = vadd.f32 %v547, %v615
        %v617 = vpop.f32.mrf.mxu0
        %618 = vmatprep.mubr.f32.mxu0 0.0
        %619 = vmatmul.mubr.f32.gmra.mxu0 %v525
        %v620 = vpop.f32.mrf.mxu0
        %v621 = vadd.f32 %v547, %v620
        %v622 = vpop.f32.mrf.mxu0
        %623 = vdwg.mxu0
        %624 = vst [vmem:[%s310] sm:$0xff] %v616
        %625 = vst [vmem:[%s310 + $0x8] sm:$0xff] %v621
        %s626 = smul.u32 2, %s20
        %p627 = scmp.lt.s32.totalorder %s626, 3
        %s628 = scalar_select %p627, %s626, 3
        %s629 = smul.addr %s628, 8
        %s630 = scalar_lea.vmem %s7, %s629
        // Predicated region
        $region57: #{nhits_block.1} parent=47 // pred_check
          %p631 = pneg %p190
        $region58: #{nhits_block.1} parent=47 // pred_check_branch
          %633 = sbr.rel (%p631) target = $region60
        $region59: #{nhits_block.1} parent=47 // pred_region
          %s634 = smul.u32 2, %s20
        $region60: #{nhits_block.1} parent=47 // pred_fallthru
          _
      $region48: #{nhits_block.1} parent=5 // pred_fallthru
        _
      %p635 = scmp.le.s32.totalorder 2, %s15
      // Predicated region
      $region61: #{nhits_block.1} parent=5 // pred_check
        %p636 = pneg %p635
      $region62: #{nhits_block.1} parent=5 // pred_check_branch
        %638 = sbr.rel (%p636) target = $region64
      $region63: #{nhits_block.1} parent=5 // pred_region
        %s639 = ssub.s32 %s15, 2
        // Predicated region
        $region65: #{nhits_block.1} parent=63 // pred_check
          %p640 = pneg %p196
        $region66: #{nhits_block.1} parent=63 // pred_check_branch
          %642 = sbr.rel (%p640) target = $region68
        $region67: #{nhits_block.1} parent=63 // pred_region
          %s643 = smul.u32 2, %s21
          %p644 = scmp.lt.s32.totalorder %s643, 3
          %s645 = scalar_select %p644, %s643, 3
          %s646 = smul.addr %s645, 8
          %s647 = scalar_lea.vmem %s7, %s646
        $region68: #{nhits_block.1} parent=63 // pred_fallthru
          _
      $region64: #{nhits_block.1} parent=5 // pred_fallthru
        _
    $region6: #{nhits_block.1} parent=1 // loop_footer
      %s19 = sadd.s32 1, %s15
    $region7: #{nhits_block.1} parent=1 // loop_footer_branch
      %14 = sbr.rel target = $region3
    $region8: #{nhits_block.1} parent=1 // loop_exit
      _
    %648 = vsyncpa [#allocation3], 1
    %s649 = scalar_lea.sflag [#allocation3], 1
    %650 = vsyncpa %s649, 1
    %651 = vsyncpa [#allocation5], 1

// kernel: nhits_block.1
$region0: #{nhits_block.1}
  #allocation0 [shape = 'u32[]', space=smem, size = 0x4, offset = 0x4, fixed_abs, tag = 'smem constant byte address 0x4 - core index']
  #allocation1 [shape = 'u32[144,128]{1,0:T(1,128)}', space=vmem, size = 0x12000, scoped, tag = 'internal scratch']
  %s0 = inlined_call_operand.vmem [shape: f32[32,128], index: 0, kind: input, shape index: {}]
  %s1 = inlined_call_operand.hbm [shape: f32[128,128], index: 1, kind: input, shape index: {}]
  %s2 = inlined_call_operand.vmem [shape: f32[1,128], index: 2, kind: input, shape index: {}]
  %s3 = inlined_call_operand.hbm [shape: f32[128,128], index: 3, kind: input, shape index: {}]
  %s4 = inlined_call_operand.vmem [shape: f32[1,128], index: 4, kind: input, shape index: {}]
  %s5 = inlined_call_operand.vmem [shape: f32[128,128], index: 5, kind: input, shape index: {}]
  %s6 = inlined_call_operand.vmem [shape: f32[1,128], index: 6, kind: input, shape index: {}]
  %s7 = inlined_call_operand.vmem [shape: f32[32,128], index: 7, kind: output, shape index: {}]
  %s8 = sld [smem:[#allocation0]]
  $region69: #{nhits_block.1} parent=0
    _
  %s10 = ssub.s32 1, %s8
  %s11 = scalar_select 0, %s10, %s8
  $region1: #{nhits_block.1} parent=0
    #allocation2 [shape = 'u8[65536]{0}', space=vmem, size = 0x10000, scoped, tag = 'input window, operand 1, single buffered']
    #allocation3 [shape = 's32[2]{0}', space=sflag, size = 0x8, scoped, tag = 'scoped memory for nhits_block.1']
    #allocation4 [shape = 'u8[65536]{0}', space=vmem, size = 0x10000, scoped, tag = 'input window, operand 3, single buffered']
    #allocation5 [shape = 's32[1]{0}', space=sflag, size = 0x4, scoped, tag = 'scoped memory for nhits_block.1']
    %12 = vsyncpa [#allocation3], 0
    %13 = vsyncpa [#allocation5], 0
    loop: start=0, step=1, limit=4
    $region2: #{nhits_block.1} parent=1 // loop_pre_header
      _
    $region3: #{nhits_block.1} parent=1 // loop_header
      %s15 = sphi 0, %s19
      %p16 = scmp.ge.s32.totalorder %s15, 4
      %s25 = sphi 0, %s27
      %s28 = sphi 0, %s25
      %s29 = sphi 0, %s28
      %s45 = sphi 0, %s29
      %s49 = sphi 0, %s49
      %s51 = sphi 0, %s49
      %s52 = sphi 0, %s51
      %s66 = sphi 0, %s52
      %s70 = sphi 0, %s70
      %s72 = sphi 0, %s70
      %s73 = sphi 0, %s72
      %s87 = sphi 0, %s73
      %s91 = sphi 0, %s91
      %s93 = sphi 0, %s91
      %s94 = sphi 0, %s93
      %s108 = sphi 0, %s94
      %s112 = sphi 0, %s112
      %s114 = sphi 0, %s112
      %s115 = sphi 0, %s114
      %s129 = sphi 0, %s115
      %s133 = sphi 0, %s133
      %s135 = sphi 0, %s133
      %s136 = sphi 0, %s135
      %s150 = sphi 0, %s136
      %s154 = sphi 0, %s154
      %s156 = sphi 0, %s154
      %s157 = sphi 0, %s156
      %s171 = sphi 0, %s157
      %s177 = sphi 0, %s179
      %s180 = sphi 0, %s177
      %s181 = sphi 0, %s180
      %s197 = sphi 0, %s181
    $region4: #{nhits_block.1} parent=1 // loop_header_branch
      %18 = sbr.rel (%p16) target = $region8
    $region5: #{nhits_block.1} parent=1 // loop_body
      %s20 = ssub.s32 %s15, 1
      %s21 = ssub.s32 %s15, 2
      %s22 = sadd.s32 %s15, 1
      %s23 = ssub.s32 %s15, %s22
      %p24 = scmp.eq.s32.totalorder %s23, 0
      %s26 = sadd.s32 %s25, 1
      %s27 = scalar_select %p24, %s25, %s26
      %p30 = pneg %p24
      %p31 = scmp.eq.s32.totalorder %s15, 1
      %p32 = por %p30, %p31
      %p33 = scmp.ne.s32.totalorder %s25, %s28
      %p34 = scmp.eq.s32.totalorder %s15, 0
      %p35 = por %p33, %p34
      %p36 = scmp.ne.s32.totalorder %s25, %s28
      %p37 = scmp.eq.s32.totalorder %s20, 1
      %p38 = por %p36, %p37
      %p39 = scmp.ne.s32.totalorder %s28, %s29
      %p40 = scmp.eq.s32.totalorder %s20, 0
      %p41 = por %p39, %p40
      %p42 = scmp.ne.s32.totalorder %s28, %s29
      %p43 = scmp.eq.s32.totalorder %s21, 1
      %p44 = por %p42, %p43
      %p46 = scmp.ne.s32.totalorder %s29, %s45
      %p47 = scmp.eq.s32.totalorder %s21, 0
      %p48 = por %p46, %p47
      %s50 = sadd.s32 %s49, 1
      %p53 = scmp.eq.s32.totalorder %s15, 1
      %p54 = scmp.ne.s32.totalorder %s49, %s51
      %p55 = scmp.eq.s32.totalorder %s15, 0
      %p56 = por %p54, %p55
      %p57 = scmp.ne.s32.totalorder %s49, %s51
      %p58 = scmp.eq.s32.totalorder %s20, 1
      %p59 = por %p57, %p58
      %p60 = scmp.ne.s32.totalorder %s51, %s52
      %p61 = scmp.eq.s32.totalorder %s20, 0
      %p62 = por %p60, %p61
      %p63 = scmp.ne.s32.totalorder %s51, %s52
      %p64 = scmp.eq.s32.totalorder %s21, 1
      %p65 = por %p63, %p64
      %p67 = scmp.ne.s32.totalorder %s52, %s66
      %p68 = scmp.eq.s32.totalorder %s21, 0
      %p69 = por %p67, %p68
      %s71 = sadd.s32 %s70, 1
      %p74 = scmp.eq.s32.totalorder %s15, 1
      %p75 = scmp.ne.s32.totalorder %s70, %s72
      %p76 = scmp.eq.s32.totalorder %s15, 0
      %p77 = por %p75, %p76
      %p78 = scmp.ne.s32.totalorder %s70, %s72
      %p79 = scmp.eq.s32.totalorder %s20, 1
      %p80 = por %p78, %p79
      %p81 = scmp.ne.s32.totalorder %s72, %s73
      %p82 = scmp.eq.s32.totalorder %s20, 0
      %p83 = por %p81, %p82
      %p84 = scmp.ne.s32.totalorder %s72, %s73
      %p85 = scmp.eq.s32.totalorder %s21, 1
      %p86 = por %p84, %p85
      %p88 = scmp.ne.s32.totalorder %s73, %s87
      %p89 = scmp.eq.s32.totalorder %s21, 0
      %p90 = por %p88, %p89
      %s92 = sadd.s32 %s91, 1
      %p95 = scmp.eq.s32.totalorder %s15, 1
      %p96 = scmp.ne.s32.totalorder %s91, %s93
      %p97 = scmp.eq.s32.totalorder %s15, 0
      %p98 = por %p96, %p97
      %p99 = scmp.ne.s32.totalorder %s91, %s93
      %p100 = scmp.eq.s32.totalorder %s20, 1
      %p101 = por %p99, %p100
      %p102 = scmp.ne.s32.totalorder %s93, %s94
      %p103 = scmp.eq.s32.totalorder %s20, 0
      %p104 = por %p102, %p103
      %p105 = scmp.ne.s32.totalorder %s93, %s94
      %p106 = scmp.eq.s32.totalorder %s21, 1
      %p107 = por %p105, %p106
      %p109 = scmp.ne.s32.totalorder %s94, %s108
      %p110 = scmp.eq.s32.totalorder %s21, 0
      %p111 = por %p109, %p110
      %s113 = sadd.s32 %s112, 1
      %p116 = scmp.eq.s32.totalorder %s15, 1
      %p117 = scmp.ne.s32.totalorder %s112, %s114
      %p118 = scmp.eq.s32.totalorder %s15, 0
      %p119 = por %p117, %p118
      %p120 = scmp.ne.s32.totalorder %s112, %s114
      %p121 = scmp.eq.s32.totalorder %s20, 1
      %p122 = por %p120, %p121
      %p123 = scmp.ne.s32.totalorder %s114, %s115
      %p124 = scmp.eq.s32.totalorder %s20, 0
      %p125 = por %p123, %p124
      %p126 = scmp.ne.s32.totalorder %s114, %s115
      %p127 = scmp.eq.s32.totalorder %s21, 1
      %p128 = por %p126, %p127
      %p130 = scmp.ne.s32.totalorder %s115, %s129
      %p131 = scmp.eq.s32.totalorder %s21, 0
      %p132 = por %p130, %p131
      %s134 = sadd.s32 %s133, 1
      %p137 = scmp.eq.s32.totalorder %s15, 1
      %p138 = scmp.ne.s32.totalorder %s133, %s135
      %p139 = scmp.eq.s32.totalorder %s15, 0
      %p140 = por %p138, %p139
      %p141 = scmp.ne.s32.totalorder %s133, %s135
      %p142 = scmp.eq.s32.totalorder %s20, 1
      %p143 = por %p141, %p142
      %p144 = scmp.ne.s32.totalorder %s135, %s136
      %p145 = scmp.eq.s32.totalorder %s20, 0
      %p146 = por %p144, %p145
      %p147 = scmp.ne.s32.totalorder %s135, %s136
      %p148 = scmp.eq.s32.totalorder %s21, 1
      %p149 = por %p147, %p148
      %p151 = scmp.ne.s32.totalorder %s136, %s150
      %p152 = scmp.eq.s32.totalorder %s21, 0
      %p153 = por %p151, %p152
      %s155 = sadd.s32 %s154, 1
      %p158 = scmp.eq.s32.totalorder %s15, 1
      %p159 = scmp.ne.s32.totalorder %s154, %s156
      %p160 = scmp.eq.s32.totalorder %s15, 0
      %p161 = por %p159, %p160
      %p162 = scmp.ne.s32.totalorder %s154, %s156
      %p163 = scmp.eq.s32.totalorder %s20, 1
      %p164 = por %p162, %p163
      %p165 = scmp.ne.s32.totalorder %s156, %s157
      %p166 = scmp.eq.s32.totalorder %s20, 0
      %p167 = por %p165, %p166
      %p168 = scmp.ne.s32.totalorder %s156, %s157
      %p169 = scmp.eq.s32.totalorder %s21, 1
      %p170 = por %p168, %p169
      %p172 = scmp.ne.s32.totalorder %s157, %s171
      %p173 = scmp.eq.s32.totalorder %s21, 0
      %p174 = por %p172, %p173
      %s175 = ssub.s32 %s15, %s22
      %p176 = scmp.eq.s32.totalorder %s175, 0
      %s178 = sadd.s32 %s177, 1
      %s179 = scalar_select %p176, %s177, %s178
      %p182 = pneg %p176
      %p183 = scmp.eq.s32.totalorder %s15, 1
      %p184 = por %p182, %p183
      %p185 = scmp.ne.s32.totalorder %s177, %s180
      %p186 = scmp.eq.s32.totalorder %s15, 0
      %p187 = por %p185, %p186
      %p188 = scmp.ne.s32.totalorder %s177, %s180
      %p189 = scmp.eq.s32.totalorder %s20, 1
      %p190 = por %p188, %p189
      %p191 = scmp.ne.s32.totalorder %s180, %s181
      %p192 = scmp.eq.s32.totalorder %s20, 0
      %p193 = por %p191, %p192
      %p194 = scmp.ne.s32.totalorder %s180, %s181
      %p195 = scmp.eq.s32.totalorder %s21, 1
      %p196 = por %p194, %p195
      %p198 = scmp.ne.s32.totalorder %s181, %s197
      %p199 = scmp.eq.s32.totalorder %s21, 0
      %p200 = por %p198, %p199
      %p201 = scmp.le.s32.totalorder 1, %s15
      %p202 = scmp.lt.s32.totalorder %s15, 3
      %p203 = pnand %p201, %p202
      %p204 = pneg %p203
      // Predicated region
      $region9: #{nhits_block.1} parent=5 // pred_check
        _
      $region10: #{nhits_block.1} parent=5 // pred_check_branch
        %206 = sbr.rel (%p203) target = $region12
      $region11: #{nhits_block.1} parent=5 // pred_region
        %s207 = ssub.s32 %s15, 1
        // Predicated region
        $region13: #{nhits_block.1} parent=11 // pred_check
          %p208 = pneg %p62
        $region14: #{nhits_block.1} parent=11 // pred_check_branch
          %210 = sbr.rel (%p208) target = $region16
        $region15: #{nhits_block.1} parent=11 // pred_region
          %s212 = ssub.s32 2048, 2048
          %213 = vsyncadd [#allocation3], %s212
          %s214 = sshll.u32 [#allocation2], 4
          %s215 = int_to_ptr.vmem [resolvable:$true] %s214
          %220 = dma.hbm_to_vmem [thread:$0]  %s1, 2048, %s215, [#allocation3], 128, 128, 8
        $region16: #{nhits_block.1} parent=11 // pred_fallthru
          _
        // Predicated region
        $region17: #{nhits_block.1} parent=11 // pred_check
          %p221 = pneg %p83
        $region18: #{nhits_block.1} parent=11 // pred_check_branch
          %223 = sbr.rel (%p221) target = $region20
        $region19: #{nhits_block.1} parent=11 // pred_region
          _
        $region20: #{nhits_block.1} parent=11 // pred_fallthru
          _
        // Predicated region
        $region21: #{nhits_block.1} parent=11 // pred_check
          %p224 = pneg %p104
        $region22: #{nhits_block.1} parent=11 // pred_check_branch
          %226 = sbr.rel (%p224) target = $region24
        $region23: #{nhits_block.1} parent=11 // pred_region
          %s228 = ssub.s32 2048, 2048
          %229 = vsyncadd [#allocation5], %s228
          %s230 = sshll.u32 [#allocation4], 4
          %s231 = int_to_ptr.vmem [resolvable:$true] %s230
          %236 = dma.hbm_to_vmem [thread:$0]  %s3, 2048, %s231, [#allocation5], 128, 128, 8
        $region24: #{nhits_block.1} parent=11 // pred_fallthru
          _
        // Predicated region
        $region25: #{nhits_block.1} parent=11 // pred_check
          %p237 = pneg %p125
        $region26: #{nhits_block.1} parent=11 // pred_check_branch
          %239 = sbr.rel (%p237) target = $region28
        $region27: #{nhits_block.1} parent=11 // pred_region
          _
        $region28: #{nhits_block.1} parent=11 // pred_fallthru
          _
        // Predicated region
        $region29: #{nhits_block.1} parent=11 // pred_check
          %p240 = pneg %p146
        $region30: #{nhits_block.1} parent=11 // pred_check_branch
          %242 = sbr.rel (%p240) target = $region32
        $region31: #{nhits_block.1} parent=11 // pred_region
          _
        $region32: #{nhits_block.1} parent=11 // pred_fallthru
          _
        // Predicated region
        $region33: #{nhits_block.1} parent=11 // pred_check
          %p243 = pneg %p167
        $region34: #{nhits_block.1} parent=11 // pred_check_branch
          %245 = sbr.rel (%p243) target = $region36
        $region35: #{nhits_block.1} parent=11 // pred_region
          _
        $region36: #{nhits_block.1} parent=11 // pred_fallthru
          _
      $region12: #{nhits_block.1} parent=5 // pred_fallthru
        _
      %p246 = scmp.lt.s32.totalorder %s15, 2
      // Predicated region
      $region37: #{nhits_block.1} parent=5 // pred_check
        %p247 = pneg %p246
      $region38: #{nhits_block.1} parent=5 // pred_check_branch
        %249 = sbr.rel (%p247) target = $region40
      $region39: #{nhits_block.1} parent=5 // pred_region
        // Predicated region
        $region41: #{nhits_block.1} parent=39 // pred_check
          %p250 = pneg %p35
        $region42: #{nhits_block.1} parent=39 // pred_check_branch
          %252 = sbr.rel (%p250) target = $region44
        $region43: #{nhits_block.1} parent=39 // pred_region
          %s253 = smul.u32 2, %s15
          %p254 = scmp.lt.s32.totalorder %s253, 3
          %s255 = scalar_select %p254, %s253, 3
          %s256 = smul.addr %s255, 8
          %s257 = scalar_lea.vmem %s0, %s256
          %s258 = smul.u32 2, %s15
        $region44: #{nhits_block.1} parent=39 // pred_fallthru
          _
      $region40: #{nhits_block.1} parent=5 // pred_fallthru
        _
      %p259 = scmp.le.s32.totalorder 1, %s15
      %p260 = scmp.lt.s32.totalorder %s15, 3
      %p261 = pnand %p259, %p260
      %p262 = pneg %p261
      // Predicated region
      $region45: #{nhits_block.1} parent=5 // pred_check
        _
      $region46: #{nhits_block.1} parent=5 // pred_check_branch
        %264 = sbr.rel (%p261) target = $region48
      $region47: #{nhits_block.1} parent=5 // pred_region
        %s265 = ssub.s32 %s15, 1
        // Predicated region
        $region49: #{nhits_block.1} parent=47 // pred_check
          %p266 = pneg %p62
        $region50: #{nhits_block.1} parent=47 // pred_check_branch
          %268 = sbr.rel (%p266) target = $region52
        $region51: #{nhits_block.1} parent=47 // pred_region
          %269 = dma.done [#allocation3], 2048
        $region52: #{nhits_block.1} parent=47 // pred_fallthru
          _
        // Predicated region
        $region53: #{nhits_block.1} parent=47 // pred_check
          %p270 = pneg %p104
        $region54: #{nhits_block.1} parent=47 // pred_check_branch
          %272 = sbr.rel (%p270) target = $region56
        $region55: #{nhits_block.1} parent=47 // pred_region
          %273 = dma.done [#allocation5], 2048
        $region56: #{nhits_block.1} parent=47 // pred_fallthru
          _
        %s274 = smul.u32 2, %s20
        %p275 = scmp.lt.s32.totalorder %s274, 3
        %s276 = scalar_select %p275, %s274, 3
        %s277 = smul.addr %s276, 8
        %s278 = scalar_lea.vmem %s0, %s277
        %p279 = pneg %p41
        %p280 = pneg %p38
        %p281 = pneg %p62
        %p282 = pneg %p59
        %p283 = pneg %p83
        %p284 = pneg %p80
        %p285 = pneg %p104
        %p286 = pneg %p101
        %p287 = pneg %p125
        %p288 = pneg %p122
        %p289 = pneg %p146
        %p290 = pneg %p143
        %p291 = pneg %p167
        %p292 = pneg %p164
        %p293 = pneg %p193
        %p294 = pneg %p190
        %s295 = smul.u32 2, %s20
        %p296 = scmp.lt.s32.totalorder %s295, 3
        %s297 = scalar_select %p296, %s295, 3
        %s298 = smul.addr %s297, 8
        %s299 = scalar_lea.vmem %s7, %s298
        %s300 = smul.u32 2, %s20
        %p301 = scmp.lt.s32.totalorder %s300, 3
        %s302 = scalar_select %p301, %s300, 3
        %s303 = smul.addr %s302, 8
        %s304 = scalar_lea.vmem %s0, %s303
        %s305 = smul.u32 2, %s20
        %s306 = smul.u32 2, %s20
        %p307 = scmp.lt.s32.totalorder %s306, 3
        %s308 = scalar_select %p307, %s306, 3
        %s309 = smul.addr %s308, 8
        %s310 = scalar_lea.vmem %s7, %s309
        %s311 = smul.u32 2, %s20
        %v312 = vld [vmem:[%s304] sm:$0xff]
        %v313 = vld [vmem:[%s304 + $0x8] sm:$0xff]
        %314 = vrot.lane.b32.xlu0 %v312, 127
        %v315 = vpop.permute.xlu0 %314
        %316 = vrot.lane.b32.xlu0 %v313, 127
        %v317 = vpop.permute.xlu0 %316
        %v318 = vmax.f32 %v312, %v315
        %v319 = vmax.f32 %v313, %v317
        %320 = vrot.lane.b32.xlu0 %v318, 126
        %v321 = vpop.permute.xlu0 %320
        %322 = vrot.lane.b32.xlu0 %v319, 126
        %v323 = vpop.permute.xlu0 %322
        %v324 = vmax.f32 %v318, %v321
        %v325 = vmax.f32 %v319, %v323
        %v326 = vld [vmem:[#allocation2] sm:$0xff]
        %v327 = vld [vmem:[#allocation2 + $0x8] sm:$0xff]
        %v328 = vld [vmem:[#allocation2 + $0x10] sm:$0xff]
        %v329 = vld [vmem:[#allocation2 + $0x18] sm:$0xff]
        %v330 = vld [vmem:[#allocation2 + $0x20] sm:$0xff]
        %v331 = vld [vmem:[#allocation2 + $0x28] sm:$0xff]
        %v332 = vld [vmem:[#allocation2 + $0x30] sm:$0xff]
        %v333 = vld [vmem:[#allocation2 + $0x38] sm:$0xff]
        %v334 = vld [vmem:[#allocation2 + $0x40] sm:$0xff]
        %v335 = vld [vmem:[#allocation2 + $0x48] sm:$0xff]
        %v336 = vld [vmem:[#allocation2 + $0x50] sm:$0xff]
        %v337 = vld [vmem:[#allocation2 + $0x58] sm:$0xff]
        %v338 = vld [vmem:[#allocation2 + $0x60] sm:$0xff]
        %v339 = vld [vmem:[#allocation2 + $0x68] sm:$0xff]
        %v340 = vld [vmem:[#allocation2 + $0x70] sm:$0xff]
        %v341 = vld [vmem:[#allocation2 + $0x78] sm:$0xff]
        %v342 = vld [vmem:[%s2] sm:$0x1]
        %v344 = vlaneseq
        %v345 = vshrl.u32 %v344, 7
        %v346 = vsub.s32 0, %v345
        %v347 = vrot.slane %v342, %v346
        %349 = vmatprep.subr.mxu0 0.0
        %350 = vmatpush1.msra.mxu0 %v341
        %351 = vmatprep.subr.mxu0 0.0
        %352 = vmatpush1.msra.mxu0 %v340
        %353 = vmatprep.subr.mxu0 0.0
        %354 = vmatpush1.msra.mxu0 %v339
        %355 = vmatprep.subr.mxu0 0.0
        %356 = vmatpush1.msra.mxu0 %v338
        %357 = vmatprep.subr.mxu0 0.0
        %358 = vmatpush1.msra.mxu0 %v337
        %359 = vmatprep.subr.mxu0 0.0
        %360 = vmatpush1.msra.mxu0 %v336
        %361 = vmatprep.subr.mxu0 0.0
        %362 = vmatpush1.msra.mxu0 %v335
        %363 = vmatprep.subr.mxu0 0.0
        %364 = vmatpush1.msra.mxu0 %v334
        %365 = vmatprep.subr.mxu0 0.0
        %366 = vmatpush1.msra.mxu0 %v333
        %367 = vmatprep.subr.mxu0 0.0
        %368 = vmatpush1.msra.mxu0 %v332
        %369 = vmatprep.subr.mxu0 0.0
        %370 = vmatpush1.msra.mxu0 %v331
        %371 = vmatprep.subr.mxu0 0.0
        %372 = vmatpush1.msra.mxu0 %v330
        %373 = vmatprep.subr.mxu0 0.0
        %374 = vmatpush1.msra.mxu0 %v329
        %375 = vmatprep.subr.mxu0 0.0
        %376 = vmatpush1.msra.mxu0 %v328
        %377 = vmatprep.subr.mxu0 0.0
        %378 = vmatpush1.msra.mxu0 %v327
        %379 = vmatprep.subr.mxu0 0.0
        %380 = vmatpush1.msra.mxu0 %v326
        %381 = vmatprep.subr.mxu0 0.0
        %382 = vmatpush2.msra.mxu0 0.0
        %383 = vmatprep.subr.mxu0 0.0
        %384 = vmatpush2.msra.mxu0 0.0
        %385 = vmatprep.subr.mxu0 0.0
        %386 = vmatpush2.msra.mxu0 0.0
        %387 = vmatprep.subr.mxu0 0.0
        %388 = vmatpush2.msra.mxu0 0.0
        %389 = vmatprep.subr.mxu0 0.0
        %390 = vmatpush2.msra.mxu0 0.0
        %391 = vmatprep.subr.mxu0 0.0
        %392 = vmatpush2.msra.mxu0 0.0
        %393 = vmatprep.subr.mxu0 0.0
        %394 = vmatpush2.msra.mxu0 0.0
        %395 = vmatprep.subr.mxu0 0.0
        %396 = vmatpush2.msra.mxu0 0.0
        %397 = vmatprep.subr.mxu0 0.0
        %398 = vmatpush2.msra.mxu0 0.0
        %399 = vmatprep.subr.mxu0 0.0
        %400 = vmatpush2.msra.mxu0 0.0
        %401 = vmatprep.subr.mxu0 0.0
        %402 = vmatpush2.msra.mxu0 0.0
        %403 = vmatprep.subr.mxu0 0.0
        %404 = vmatpush2.msra.mxu0 0.0
        %405 = vmatprep.subr.mxu0 0.0
        %406 = vmatpush2.msra.mxu0 0.0
        %407 = vmatprep.subr.mxu0 0.0
        %408 = vmatpush2.msra.mxu0 0.0
        %409 = vmatprep.subr.mxu0 0.0
        %410 = vmatpush2.msra.mxu0 0.0
        %411 = vmatprep.subr.mxu0 0.0
        %412 = vmatpush2.msra.mxu0 0.0
        %413 = vmatprep.mubr.f32.mxu0 0.0
        %414 = vmatmul.mubr.f32.gmra.mxu0 %v324
        %v415 = vpop.f32.mrf.mxu0
        %v416 = vadd.f32 %v347, %v415
        %v417 = vpop.f32.mrf.mxu0
        %418 = vmatprep.mubr.f32.mxu0 0.0
        %419 = vmatmul.mubr.f32.gmra.mxu0 %v325
        %v420 = vpop.f32.mrf.mxu0
        %v421 = vadd.f32 %v347, %v420
        %v422 = vpop.f32.mrf.mxu0
        %423 = vdwg.mxu0
        %v424 = vmax.f32 %v416, 0.0
        %v425 = vmax.f32 %v421, 0.0
        %v426 = vld [vmem:[#allocation4] sm:$0xff]
        %v427 = vld [vmem:[#allocation4 + $0x8] sm:$0xff]
        %v428 = vld [vmem:[#allocation4 + $0x10] sm:$0xff]
        %v429 = vld [vmem:[#allocation4 + $0x18] sm:$0xff]
        %v430 = vld [vmem:[#allocation4 + $0x20] sm:$0xff]
        %v431 = vld [vmem:[#allocation4 + $0x28] sm:$0xff]
        %v432 = vld [vmem:[#allocation4 + $0x30] sm:$0xff]
        %v433 = vld [vmem:[#allocation4 + $0x38] sm:$0xff]
        %v434 = vld [vmem:[#allocation4 + $0x40] sm:$0xff]
        %v435 = vld [vmem:[#allocation4 + $0x48] sm:$0xff]
        %v436 = vld [vmem:[#allocation4 + $0x50] sm:$0xff]
        %v437 = vld [vmem:[#allocation4 + $0x58] sm:$0xff]
        %v438 = vld [vmem:[#allocation4 + $0x60] sm:$0xff]
        %v439 = vld [vmem:[#allocation4 + $0x68] sm:$0xff]
        %v440 = vld [vmem:[#allocation4 + $0x70] sm:$0xff]
        %v441 = vld [vmem:[#allocation4 + $0x78] sm:$0xff]
        %v442 = vld [vmem:[%s4] sm:$0x1]
        %v444 = vlaneseq
        %v445 = vshrl.u32 %v444, 7
        %v446 = vsub.s32 0, %v445
        %v447 = vrot.slane %v442, %v446
        %449 = vmatprep.subr.mxu0 0.0
        %450 = vmatpush1.msra.mxu0 %v441
        %451 = vmatprep.subr.mxu0 0.0
        %452 = vmatpush1.msra.mxu0 %v440
        %453 = vmatprep.subr.mxu0 0.0
        %454 = vmatpush1.msra.mxu0 %v439
        %455 = vmatprep.subr.mxu0 0.0
        %456 = vmatpush1.msra.mxu0 %v438
        %457 = vmatprep.subr.mxu0 0.0
        %458 = vmatpush1.msra.mxu0 %v437
        %459 = vmatprep.subr.mxu0 0.0
        %460 = vmatpush1.msra.mxu0 %v436
        %461 = vmatprep.subr.mxu0 0.0
        %462 = vmatpush1.msra.mxu0 %v435
        %463 = vmatprep.subr.mxu0 0.0
        %464 = vmatpush1.msra.mxu0 %v434
        %465 = vmatprep.subr.mxu0 0.0
        %466 = vmatpush1.msra.mxu0 %v433
        %467 = vmatprep.subr.mxu0 0.0
        %468 = vmatpush1.msra.mxu0 %v432
        %469 = vmatprep.subr.mxu0 0.0
        %470 = vmatpush1.msra.mxu0 %v431
        %471 = vmatprep.subr.mxu0 0.0
        %472 = vmatpush1.msra.mxu0 %v430
        %473 = vmatprep.subr.mxu0 0.0
        %474 = vmatpush1.msra.mxu0 %v429
        %475 = vmatprep.subr.mxu0 0.0
        %476 = vmatpush1.msra.mxu0 %v428
        %477 = vmatprep.subr.mxu0 0.0
        %478 = vmatpush1.msra.mxu0 %v427
        %479 = vmatprep.subr.mxu0 0.0
        %480 = vmatpush1.msra.mxu0 %v426
        %481 = vmatprep.subr.mxu0 0.0
        %482 = vmatpush2.msra.mxu0 0.0
        %483 = vmatprep.subr.mxu0 0.0
        %484 = vmatpush2.msra.mxu0 0.0
        %485 = vmatprep.subr.mxu0 0.0
        %486 = vmatpush2.msra.mxu0 0.0
        %487 = vmatprep.subr.mxu0 0.0
        %488 = vmatpush2.msra.mxu0 0.0
        %489 = vmatprep.subr.mxu0 0.0
        %490 = vmatpush2.msra.mxu0 0.0
        %491 = vmatprep.subr.mxu0 0.0
        %492 = vmatpush2.msra.mxu0 0.0
        %493 = vmatprep.subr.mxu0 0.0
        %494 = vmatpush2.msra.mxu0 0.0
        %495 = vmatprep.subr.mxu0 0.0
        %496 = vmatpush2.msra.mxu0 0.0
        %497 = vmatprep.subr.mxu0 0.0
        %498 = vmatpush2.msra.mxu0 0.0
        %499 = vmatprep.subr.mxu0 0.0
        %500 = vmatpush2.msra.mxu0 0.0
        %501 = vmatprep.subr.mxu0 0.0
        %502 = vmatpush2.msra.mxu0 0.0
        %503 = vmatprep.subr.mxu0 0.0
        %504 = vmatpush2.msra.mxu0 0.0
        %505 = vmatprep.subr.mxu0 0.0
        %506 = vmatpush2.msra.mxu0 0.0
        %507 = vmatprep.subr.mxu0 0.0
        %508 = vmatpush2.msra.mxu0 0.0
        %509 = vmatprep.subr.mxu0 0.0
        %510 = vmatpush2.msra.mxu0 0.0
        %511 = vmatprep.subr.mxu0 0.0
        %512 = vmatpush2.msra.mxu0 0.0
        %513 = vmatprep.mubr.f32.mxu0 0.0
        %514 = vmatmul.mubr.f32.gmra.mxu0 %v424
        %v515 = vpop.f32.mrf.mxu0
        %v516 = vadd.f32 %v447, %v515
        %v517 = vpop.f32.mrf.mxu0
        %518 = vmatprep.mubr.f32.mxu0 0.0
        %519 = vmatmul.mubr.f32.gmra.mxu0 %v425
        %v520 = vpop.f32.mrf.mxu0
        %v521 = vadd.f32 %v447, %v520
        %v522 = vpop.f32.mrf.mxu0
        %523 = vdwg.mxu0
        %v524 = vmax.f32 %v516, 0.0
        %v525 = vmax.f32 %v521, 0.0
        %v526 = vld [vmem:[%s5] sm:$0xff]
        %v527 = vld [vmem:[%s5 + $0x8] sm:$0xff]
        %v528 = vld [vmem:[%s5 + $0x10] sm:$0xff]
        %v529 = vld [vmem:[%s5 + $0x18] sm:$0xff]
        %v530 = vld [vmem:[%s5 + $0x20] sm:$0xff]
        %v531 = vld [vmem:[%s5 + $0x28] sm:$0xff]
        %v532 = vld [vmem:[%s5 + $0x30] sm:$0xff]
        %v533 = vld [vmem:[%s5 + $0x38] sm:$0xff]
        %v534 = vld [vmem:[%s5 + $0x40] sm:$0xff]
        %v535 = vld [vmem:[%s5 + $0x48] sm:$0xff]
        %v536 = vld [vmem:[%s5 + $0x50] sm:$0xff]
        %v537 = vld [vmem:[%s5 + $0x58] sm:$0xff]
        %v538 = vld [vmem:[%s5 + $0x60] sm:$0xff]
        %v539 = vld [vmem:[%s5 + $0x68] sm:$0xff]
        %v540 = vld [vmem:[%s5 + $0x70] sm:$0xff]
        %v541 = vld [vmem:[%s5 + $0x78] sm:$0xff]
        %v542 = vld [vmem:[%s6] sm:$0x1]
        %v544 = vlaneseq
        %v545 = vshrl.u32 %v544, 7
        %v546 = vsub.s32 0, %v545
        %v547 = vrot.slane %v542, %v546
        %549 = vmatprep.subr.mxu0 0.0
        %550 = vmatpush1.msra.mxu0 %v541
        %551 = vmatprep.subr.mxu0 0.0
        %552 = vmatpush1.msra.mxu0 %v540
        %553 = vmatprep.subr.mxu0 0.0
        %554 = vmatpush1.msra.mxu0 %v539
        %555 = vmatprep.subr.mxu0 0.0
        %556 = vmatpush1.msra.mxu0 %v538
        %557 = vmatprep.subr.mxu0 0.0
        %558 = vmatpush1.msra.mxu0 %v537
        %559 = vmatprep.subr.mxu0 0.0
        %560 = vmatpush1.msra.mxu0 %v536
        %561 = vmatprep.subr.mxu0 0.0
        %562 = vmatpush1.msra.mxu0 %v535
        %563 = vmatprep.subr.mxu0 0.0
        %564 = vmatpush1.msra.mxu0 %v534
        %565 = vmatprep.subr.mxu0 0.0
        %566 = vmatpush1.msra.mxu0 %v533
        %567 = vmatprep.subr.mxu0 0.0
        %568 = vmatpush1.msra.mxu0 %v532
        %569 = vmatprep.subr.mxu0 0.0
        %570 = vmatpush1.msra.mxu0 %v531
        %571 = vmatprep.subr.mxu0 0.0
        %572 = vmatpush1.msra.mxu0 %v530
        %573 = vmatprep.subr.mxu0 0.0
        %574 = vmatpush1.msra.mxu0 %v529
        %575 = vmatprep.subr.mxu0 0.0
        %576 = vmatpush1.msra.mxu0 %v528
        %577 = vmatprep.subr.mxu0 0.0
        %578 = vmatpush1.msra.mxu0 %v527
        %579 = vmatprep.subr.mxu0 0.0
        %580 = vmatpush1.msra.mxu0 %v526
        %581 = vmatprep.subr.mxu0 0.0
        %582 = vmatpush2.msra.mxu0 0.0
        %583 = vmatprep.subr.mxu0 0.0
        %584 = vmatpush2.msra.mxu0 0.0
        %585 = vmatprep.subr.mxu0 0.0
        %586 = vmatpush2.msra.mxu0 0.0
        %587 = vmatprep.subr.mxu0 0.0
        %588 = vmatpush2.msra.mxu0 0.0
        %589 = vmatprep.subr.mxu0 0.0
        %590 = vmatpush2.msra.mxu0 0.0
        %591 = vmatprep.subr.mxu0 0.0
        %592 = vmatpush2.msra.mxu0 0.0
        %593 = vmatprep.subr.mxu0 0.0
        %594 = vmatpush2.msra.mxu0 0.0
        %595 = vmatprep.subr.mxu0 0.0
        %596 = vmatpush2.msra.mxu0 0.0
        %597 = vmatprep.subr.mxu0 0.0
        %598 = vmatpush2.msra.mxu0 0.0
        %599 = vmatprep.subr.mxu0 0.0
        %600 = vmatpush2.msra.mxu0 0.0
        %601 = vmatprep.subr.mxu0 0.0
        %602 = vmatpush2.msra.mxu0 0.0
        %603 = vmatprep.subr.mxu0 0.0
        %604 = vmatpush2.msra.mxu0 0.0
        %605 = vmatprep.subr.mxu0 0.0
        %606 = vmatpush2.msra.mxu0 0.0
        %607 = vmatprep.subr.mxu0 0.0
        %608 = vmatpush2.msra.mxu0 0.0
        %609 = vmatprep.subr.mxu0 0.0
        %610 = vmatpush2.msra.mxu0 0.0
        %611 = vmatprep.subr.mxu0 0.0
        %612 = vmatpush2.msra.mxu0 0.0
        %613 = vmatprep.mubr.f32.mxu0 0.0
        %614 = vmatmul.mubr.f32.gmra.mxu0 %v524
        %v615 = vpop.f32.mrf.mxu0
        %v616 = vadd.f32 %v547, %v615
        %v617 = vpop.f32.mrf.mxu0
        %618 = vmatprep.mubr.f32.mxu0 0.0
        %619 = vmatmul.mubr.f32.gmra.mxu0 %v525
        %v620 = vpop.f32.mrf.mxu0
        %v621 = vadd.f32 %v547, %v620
        %v622 = vpop.f32.mrf.mxu0
        %623 = vdwg.mxu0
        %624 = vst [vmem:[%s310] sm:$0xff] %v616
        %625 = vst [vmem:[%s310 + $0x8] sm:$0xff] %v621
        %s626 = smul.u32 2, %s20
        %p627 = scmp.lt.s32.totalorder %s626, 3
        %s628 = scalar_select %p627, %s626, 3
        %s629 = smul.addr %s628, 8
        %s630 = scalar_lea.vmem %s7, %s629
        // Predicated region
        $region57: #{nhits_block.1} parent=47 // pred_check
          %p631 = pneg %p190
        $region58: #{nhits_block.1} parent=47 // pred_check_branch
          %633 = sbr.rel (%p631) target = $region60
        $region59: #{nhits_block.1} parent=47 // pred_region
          %s634 = smul.u32 2, %s20
        $region60: #{nhits_block.1} parent=47 // pred_fallthru
          _
      $region48: #{nhits_block.1} parent=5 // pred_fallthru
        _
      %p635 = scmp.le.s32.totalorder 2, %s15
      // Predicated region
      $region61: #{nhits_block.1} parent=5 // pred_check
        %p636 = pneg %p635
      $region62: #{nhits_block.1} parent=5 // pred_check_branch
        %638 = sbr.rel (%p636) target = $region64
      $region63: #{nhits_block.1} parent=5 // pred_region
        %s639 = ssub.s32 %s15, 2
        // Predicated region
        $region65: #{nhits_block.1} parent=63 // pred_check
          %p640 = pneg %p196
        $region66: #{nhits_block.1} parent=63 // pred_check_branch
          %642 = sbr.rel (%p640) target = $region68
        $region67: #{nhits_block.1} parent=63 // pred_region
          %s643 = smul.u32 2, %s21
          %p644 = scmp.lt.s32.totalorder %s643, 3
          %s645 = scalar_select %p644, %s643, 3
          %s646 = smul.addr %s645, 8
          %s647 = scalar_lea.vmem %s7, %s646
        $region68: #{nhits_block.1} parent=63 // pred_fallthru
          _
      $region64: #{nhits_block.1} parent=5 // pred_fallthru
        _
    $region6: #{nhits_block.1} parent=1 // loop_footer
      %s19 = sadd.s32 1, %s15
    $region7: #{nhits_block.1} parent=1 // loop_footer_branch
      %14 = sbr.rel target = $region3
    $region8: #{nhits_block.1} parent=1 // loop_exit
      _
    %648 = vsyncpa [#allocation3], 1
    %s649 = scalar_lea.sflag [#allocation3], 1
    %650 = vsyncpa %s649, 1
    %651 = vsyncpa [#allocation5], 1

</llo_original>
